<compile_context>
chip_gen: v5e
topology: v5e:2x2
jax: 0.10.0
libtpu: 0.0.40
codegen_flags: <defaults>
</compile_context>

<pallas_src>
import functools
import math

import jax
import jax.numpy as jnp
from jax.experimental import pallas as pl
from jax.experimental.pallas import tpu as pltpu


# --------------------------- fused DecoderLayer kernel ---------------------------

def _decoder_layer_kernel(x_ref, wqkv_ref, bqkv_ref, wo_ref, bo_ref,
                          g1_ref, beta1_ref, w1_ref, fb1_ref, w2_ref, fb2_ref,
                          g2_ref, beta2_ref, o_ref, *, num_heads, d_model):
    S = x_ref.shape[1]
    dk = d_model // num_heads

    x = x_ref[0]                                   # (S, D) f32
    x_bf = x.astype(jnp.bfloat16)

    # ---- fused QKV projection: one bf16 matmul against [D, 3D], f32 accumulate ----
    qkv = jnp.dot(x_bf, wqkv_ref[...], preferred_element_type=jnp.float32)
    qkv = qkv + bqkv_ref[...]                      # 1/sqrt(dk) already folded into Wq/bq
    q = qkv[:, :d_model]
    k = qkv[:, d_model:2 * d_model]
    v = qkv[:, 2 * d_model:]

    # causal mask (flex_attention block_mask assumed causal); large finite negative, not -inf
    row = jax.lax.broadcasted_iota(jnp.int32, (S, S), 0)
    col = jax.lax.broadcasted_iota(jnp.int32, (S, S), 1)
    causal = row >= col
    neg_big = jnp.float32(-1e30)

    wo = wo_ref[...]                               # (D, D) bf16, pinned

    # per-head attention; W_o applied per head (sublane row-slab) and accumulated -> no
    # lane-axis concatenate.  # TODO(synk): KV blocking + skip fully-masked blocks at large S.
    attn_out = jnp.zeros((S, d_model), jnp.float32)
    for h in range(num_heads):                     # static Python loop, static slices
        lo = h * dk
        qh = q[:, lo:lo + dk].astype(jnp.bfloat16)
        kh = k[:, lo:lo + dk].astype(jnp.bfloat16)
        vh = v[:, lo:lo + dk].astype(jnp.bfloat16)

        s = jnp.dot(qh, kh.T, preferred_element_type=jnp.float32)      # (S, S) f32
        s = jnp.where(causal, s, neg_big)
        m = jnp.max(s, axis=-1, keepdims=True)
        p = jnp.exp(s - m)                                             # f32 (EUP)
        denom = jnp.sum(p, axis=-1, keepdims=True)                     # (S, 1)

        pv = jnp.dot(p.astype(jnp.bfloat16), vh,
                     preferred_element_type=jnp.float32)               # (S, dk)
        head = pv * pl.reciprocal(denom, approx=False)                 # deferred softmax norm
        attn_out = attn_out + jnp.dot(head.astype(jnp.bfloat16), wo[lo:lo + dk, :],
                                      preferred_element_type=jnp.float32)
    attn_out = attn_out + bo_ref[...]

    # ---- residual + LayerNorm1 (dropout = identity in eval mode), f32 ----
    s1 = x + attn_out
    mean1 = jnp.mean(s1, axis=-1, keepdims=True)
    var1 = jnp.mean((s1 - mean1) ** 2, axis=-1, keepdims=True)
    x1 = (s1 - mean1) * jax.lax.rsqrt(var1 + 1e-5) * g1_ref[...] + beta1_ref[...]

    # ---- FFN: relu(x1 @ W1 + b1) @ W2 + b2, bf16 operands / f32 accumulate ----
    # TODO(synk): F-chunk loop (ff += relu(x1@W1[:, f0:f1]+b1)@W2[f0:f1, :]) for large D*F.
    hdn = jnp.dot(x1.astype(jnp.bfloat16), w1_ref[...],
                  preferred_element_type=jnp.float32) + fb1_ref[...]
    hdn = jnp.maximum(hdn, 0.0)
    ff = jnp.dot(hdn.astype(jnp.bfloat16), w2_ref[...],
                 preferred_element_type=jnp.float32) + fb2_ref[...]

    # ---- residual + LayerNorm2 ----
    s2 = x1 + ff
    mean2 = jnp.mean(s2, axis=-1, keepdims=True)
    var2 = jnp.mean((s2 - mean2) ** 2, axis=-1, keepdims=True)
    x2 = (s2 - mean2) * jax.lax.rsqrt(var2 + 1e-5) * g2_ref[...] + beta2_ref[...]

    o_ref[0] = x2.astype(o_ref.dtype)


def _vmem_budget_bytes(S, D, F):
    bf16, f32 = 2, 4
    weights = (3 * D * D + D * D + D * F + F * D) * bf16        # wqkv, wo, w1, w2
    vectors = (3 * D + 7 * D + F) * f32                          # biases + gammas + betas
    tiles = 2 * S * D * f32                                      # x tile + out tile
    per_iter = weights + vectors + tiles
    # 2x for double-buffering + headroom; clamp under v7x physical VMEM.
    return int(min(max(2 * per_iter + (4 << 20), 8 << 20), 48 << 20))


def decoder_layer(x, p, *, num_heads):
    """x: [B, S, D] f32 -> [B, S, D] f32. `p` = prepare_params(...) output. num_heads static."""
    B, S, D = x.shape
    F = p["w1"].shape[1]
    kernel = functools.partial(_decoder_layer_kernel, num_heads=num_heads, d_model=D)

    def pinned(shape):
        return pl.BlockSpec(shape, lambda b: (0,) * len(shape))

    cost = pl.CostEstimate(
        flops=B * (8 * S * D * D + 4 * S * S * D + 4 * S * D * F),
        transcendentals=B * (num_heads * S * S + num_heads * S + 2 * S),
        bytes_accessed=8 * B * S * D + 2 * (4 * D * D + 2 * D * F) + 4 * (10 * D + F),
    )

    return pl.pallas_call(
        kernel,
        out_shape=jax.ShapeDtypeStruct((B, S, D), jnp.float32),
        grid=(B,),
        in_specs=[
            pl.BlockSpec((1, S, D), lambda b: (b, 0, 0)),   # x, per-batch tile
            pinned((D, 3 * D)),                             # fused QKV weight (bf16, scale folded)
            pinned((1, 3 * D)),                             # fused QKV bias (f32)
            pinned((D, D)),                                 # W_o (bf16)
            pinned((1, D)),                                 # b_o
            pinned((1, D)),                                 # gamma1
            pinned((1, D)),                                 # beta1
            pinned((D, F)),                                 # W1 (bf16)
            pinned((1, F)),                                 # b1
            pinned((F, D)),                                 # W2 (bf16)
            pinned((1, D)),                                 # b2
            pinned((1, D)),                                 # gamma2
            pinned((1, D)),                                 # beta2
        ],
        out_specs=pl.BlockSpec((1, S, D), lambda b: (b, 0, 0)),
        compiler_params=pltpu.CompilerParams(
            dimension_semantics=("parallel",),
            vmem_limit_bytes=_vmem_budget_bytes(S, D, F)),
        cost_estimate=cost,
    )(x, p["wqkv"], p["bqkv"], p["wo"], p["bo"], p["g1"], p["beta1"],
      p["w1"], p["fb1"], p["w2"], p["fb2"], p["g2"], p["beta2"])


# ------------------------ one-time parameter preparation ------------------------

def prepare_params(raw, *, num_heads):
    """Concatenate QKV weights, fold 1/sqrt(d_k) into Wq/bq, cast weights to bf16.

    Called ONCE (outside the per-call path) so the [D, 3D] concat is never re-materialized.
    """
    D = raw["wq"].shape[0]
    F = raw["w1"].shape[1]
    scale = 1.0 / math.sqrt(D // num_heads)
    wqkv = jnp.concatenate([raw["wq"] * scale, raw["wk"], raw["wv"]], axis=1)
    bqkv = jnp.concatenate([raw["bq"] * scale, raw["bk"], raw["bv"]], axis=0)
    f32, bf16 = jnp.float32, jnp.bfloat16
    return dict(
        wqkv=wqkv.astype(bf16),
        bqkv=bqkv.reshape(1, 3 * D).astype(f32),
        wo=raw["wo"].astype(bf16),
        bo=raw["bo"].reshape(1, D).astype(f32),
        g1=raw["g1"].reshape(1, D).astype(f32),
        beta1=raw["beta1"].reshape(1, D).astype(f32),
        w1=raw["w1"].astype(bf16),
        fb1=raw["b1"].reshape(1, F).astype(f32),
        w2=raw["w2"].astype(bf16),
        fb2=raw["b2"].reshape(1, D).astype(f32),
        g2=raw["g2"].reshape(1, D).astype(f32),
        beta2=raw["beta2"].reshape(1, D).astype(f32),
    )


# ------------------------------ pure-JAX reference ------------------------------

def decoder_layer_ref(x, params, num_heads):
    B, S, D = x.shape
    dk = D // num_heads
    xt = x.reshape(B * S, D)
    hi = jax.lax.Precision.HIGHEST

    def lin(t, w, b):
        return jnp.dot(t, w, precision=hi) + b

    q = lin(xt, params["wq"], params["bq"]).reshape(B, S, num_heads, dk).transpose(0, 2, 1, 3)
    k = lin(xt, params["wk"], params["bk"]).reshape(B, S, num_heads, dk).transpose(0, 2, 1, 3)
    v = lin(xt, params["wv"], params["bv"]).reshape(B, S, num_heads, dk).transpose(0, 2, 1, 3)
    s = jnp.einsum("bhqd,bhkd->bhqk", q, k, precision=hi) / math.sqrt(dk)
    causal = jnp.tril(jnp.ones((S, S), dtype=bool))
    s = jnp.where(causal, s, -jnp.inf)
    p = jax.nn.softmax(s, axis=-1)
    attn = jnp.einsum("bhqk,bhkd->bhqd", p, v, precision=hi)
    attn = attn.transpose(0, 2, 1, 3).reshape(B * S, D)
    attn = lin(attn, params["wo"], params["bo"])

    def ln(t, g, b):
        m = t.mean(-1, keepdims=True)
        vv = ((t - m) ** 2).mean(-1, keepdims=True)
        return (t - m) / jnp.sqrt(vv + 1e-5) * g + b

    x1 = ln(xt + attn, params["g1"], params["beta1"])
    ff = lin(jnp.maximum(lin(x1, params["w1"], params["b1"]), 0.0),
             params["w2"], params["b2"])
    x2 = ln(x1 + ff, params["g2"], params["beta2"])
    return x2.reshape(B, S, D)


# -------------------------------------- main -------------------------------------

if __name__ == "__main__":
    B, S, D, H, F = 2, 8, 32, 4, 64  # batch, seq, d_model, num_heads, d_ff

    key = jax.random.PRNGKey(0)
    ks = jax.random.split(key, 16)
    init = lambda k, shape: (0.05 * jax.random.normal(k, shape)).astype(jnp.float32)

    params = {
        # attention projections, stored as [in, out] (pre-transposed vs. torch Linear)
        "wq": init(ks[0], (D, D)), "bq": init(ks[1], (D,)),
        "wk": init(ks[2], (D, D)), "bk": init(ks[3], (D,)),
        "wv": init(ks[4], (D, D)), "bv": init(ks[5], (D,)),
        "wo": init(ks[6], (D, D)), "bo": init(ks[7], (D,)),
        # feed-forward
        "w1": init(ks[8], (D, F)), "b1": init(ks[9], (F,)),
        "w2": init(ks[10], (F, D)), "b2": init(ks[11], (D,)),
        # layernorms
        "g1": jnp.ones((D,), jnp.float32), "beta1": jnp.zeros((D,), jnp.float32),
        "g2": jnp.ones((D,), jnp.float32), "beta2": jnp.zeros((D,), jnp.float32),
    }

    x = jax.random.normal(ks[12], (B, S, D), dtype=jnp.float32)

    prepared = prepare_params(params, num_heads=H)   # one-time: concat + scale fold + bf16 cast

    fwd = jax.jit(decoder_layer, static_argnames=("num_heads",))
    out = jax.block_until_ready(fwd(x, prepared, num_heads=H))

    ref = decoder_layer_ref(x, params, H)
    assert out.shape == (B, S, D)
    # bf16 MXU operands (f32 accumulate) -> slightly looser tolerance vs. the f32 reference
    max_err = float(jnp.max(jnp.abs(out - ref)))
    assert jnp.allclose(out, ref, atol=3e-2, rtol=3e-2), f"Pallas mismatch, max_err={max_err}"

    print("KERNEL_OK")
</pallas_src>

<mosaic_0001>
module attributes {stable_mosaic.version = 11 : i64} {
  func.func @_decoder_layer_kernel(%arg0: i32, %arg1: memref<1x8x32xf32, #tpu.memory_space<vmem>>, %arg2: memref<32x96xbf16, #tpu.memory_space<vmem>>, %arg3: memref<1x96xf32, #tpu.memory_space<vmem>>, %arg4: memref<32x32xbf16, #tpu.memory_space<vmem>>, %arg5: memref<1x32xf32, #tpu.memory_space<vmem>>, %arg6: memref<1x32xf32, #tpu.memory_space<vmem>>, %arg7: memref<1x32xf32, #tpu.memory_space<vmem>>, %arg8: memref<32x64xbf16, #tpu.memory_space<vmem>>, %arg9: memref<1x64xf32, #tpu.memory_space<vmem>>, %arg10: memref<64x32xbf16, #tpu.memory_space<vmem>>, %arg11: memref<1x32xf32, #tpu.memory_space<vmem>>, %arg12: memref<1x32xf32, #tpu.memory_space<vmem>>, %arg13: memref<1x32xf32, #tpu.memory_space<vmem>>, %arg14: memref<1x8x32xf32, #tpu.memory_space<vmem>>) attributes {dimension_semantics = [#tpu.dimension_semantics<parallel>], iteration_bounds = array<i64: 2>, scalar_prefetch = 0 : i64, scratch_operands = 0 : i64, tpu.core_type = #tpu.core_type<tc>, window_params = [{transform_indices = @transform_0, window_bounds = array<i64: 1, 8, 32>}, {pipeline_mode = #tpu.pipeline_mode<synchronous>, transform_indices = @transform_1, window_bounds = array<i64: 32, 96>}, {pipeline_mode = #tpu.pipeline_mode<synchronous>, transform_indices = @transform_2, window_bounds = array<i64: 1, 96>}, {pipeline_mode = #tpu.pipeline_mode<synchronous>, transform_indices = @transform_3, window_bounds = array<i64: 32, 32>}, {pipeline_mode = #tpu.pipeline_mode<synchronous>, transform_indices = @transform_4, window_bounds = array<i64: 1, 32>}, {pipeline_mode = #tpu.pipeline_mode<synchronous>, transform_indices = @transform_5, window_bounds = array<i64: 1, 32>}, {pipeline_mode = #tpu.pipeline_mode<synchronous>, transform_indices = @transform_6, window_bounds = array<i64: 1, 32>}, {pipeline_mode = #tpu.pipeline_mode<synchronous>, transform_indices = @transform_7, window_bounds = array<i64: 32, 64>}, {pipeline_mode = #tpu.pipeline_mode<synchronous>, transform_indices = @transform_8, window_bounds = array<i64: 1, 64>}, {pipeline_mode = #tpu.pipeline_mode<synchronous>, transform_indices = @transform_9, window_bounds = array<i64: 64, 32>}, {pipeline_mode = #tpu.pipeline_mode<synchronous>, transform_indices = @transform_10, window_bounds = array<i64: 1, 32>}, {pipeline_mode = #tpu.pipeline_mode<synchronous>, transform_indices = @transform_11, window_bounds = array<i64: 1, 32>}, {pipeline_mode = #tpu.pipeline_mode<synchronous>, transform_indices = @transform_12, window_bounds = array<i64: 1, 32>}, {transform_indices = @transform_13, window_bounds = array<i64: 1, 8, 32>}]} {
    %c0 = arith.constant 0 : index
    %c0_0 = arith.constant 0 : index
    %c0_1 = arith.constant 0 : index
    %0 = vector.load %arg1[%c0, %c0_0, %c0_1] : memref<1x8x32xf32, #tpu.memory_space<vmem>>, vector<1x8x32xf32>
    %1 = vector.shape_cast %0 : vector<1x8x32xf32> to vector<8x32xf32>
    %2 = arith.truncf %1 : vector<8x32xf32> to vector<8x32xbf16>
    %c0_2 = arith.constant 0 : index
    %c0_3 = arith.constant 0 : index
    %3 = vector.load %arg2[%c0_2, %c0_3] : memref<32x96xbf16, #tpu.memory_space<vmem>>, vector<32x96xbf16>
    %cst = arith.constant dense<0.000000e+00> : vector<8x96xf32>
    %4 = tpu.matmul %2, %3, %cst {dimension_numbers = #tpu.dot_dimension_numbers<[1], [0], [0], [1], [0, 0, 1, 1], [], []>} : vector<8x32xbf16>, vector<32x96xbf16>, vector<8x96xf32> -> vector<8x96xf32>
    %c0_4 = arith.constant 0 : index
    %c0_5 = arith.constant 0 : index
    %5 = vector.load %arg3[%c0_4, %c0_5] : memref<1x96xf32, #tpu.memory_space<vmem>>, vector<1x96xf32>
    %6 = vector.broadcast %5 : vector<1x96xf32> to vector<8x96xf32>
    %7 = arith.addf %4, %6 : vector<8x96xf32>
    %8 = vector.extract_strided_slice %7 {offsets = [0, 0], sizes = [8, 32], strides = [1, 1]} : vector<8x96xf32> to vector<8x32xf32>
    %9 = vector.extract_strided_slice %7 {offsets = [0, 32], sizes = [8, 32], strides = [1, 1]} : vector<8x96xf32> to vector<8x32xf32>
    %10 = vector.extract_strided_slice %7 {offsets = [0, 64], sizes = [8, 32], strides = [1, 1]} : vector<8x96xf32> to vector<8x32xf32>
    %11 = tpu.iota {dimensions = array<i32: 0>} : vector<8x8xi32>
    %12 = tpu.iota {dimensions = array<i32: 1>} : vector<8x8xi32>
    %13 = arith.cmpi sge, %11, %12 : vector<8x8xi32>
    %c0_6 = arith.constant 0 : index
    %c0_7 = arith.constant 0 : index
    %14 = vector.load %arg4[%c0_6, %c0_7] : memref<32x32xbf16, #tpu.memory_space<vmem>>, vector<32x32xbf16>
    %cst_8 = arith.constant 0.000000e+00 : f32
    %15 = vector.broadcast %cst_8 : f32 to vector<8x32xf32>
    %16 = vector.extract_strided_slice %8 {offsets = [0, 0], sizes = [8, 8], strides = [1, 1]} : vector<8x32xf32> to vector<8x8xf32>
    %17 = arith.truncf %16 : vector<8x8xf32> to vector<8x8xbf16>
    %18 = vector.extract_strided_slice %9 {offsets = [0, 0], sizes = [8, 8], strides = [1, 1]} : vector<8x32xf32> to vector<8x8xf32>
    %19 = arith.truncf %18 : vector<8x8xf32> to vector<8x8xbf16>
    %20 = vector.extract_strided_slice %10 {offsets = [0, 0], sizes = [8, 8], strides = [1, 1]} : vector<8x32xf32> to vector<8x8xf32>
    %21 = arith.truncf %20 : vector<8x8xf32> to vector<8x8xbf16>
    %22 = tpu.transpose %19, [1, 0] : vector<8x8xbf16> -> vector<8x8xbf16>
    %cst_9 = arith.constant dense<0.000000e+00> : vector<8x8xf32>
    %23 = tpu.matmul %17, %22, %cst_9 {dimension_numbers = #tpu.dot_dimension_numbers<[1], [0], [0], [1], [0, 0, 1, 1], [], []>} : vector<8x8xbf16>, vector<8x8xbf16>, vector<8x8xf32> -> vector<8x8xf32>
    %cst_10 = arith.constant -1.000000e+30 : f32
    %24 = vector.broadcast %cst_10 : f32 to vector<8x8xf32>
    %25 = arith.select %13, %23, %24 : vector<8x8xi1>, vector<8x8xf32>
    %cst_11 = arith.constant dense<0xFF800000> : vector<8xf32>
    %26 = vector.multi_reduction <maximumf>, %25, %cst_11 [1] : vector<8x8xf32> to vector<8xf32>
    %27 = vector.shape_cast %26 : vector<8xf32> to vector<8x1xf32>
    %28 = vector.broadcast %27 : vector<8x1xf32> to vector<8x8xf32>
    %29 = arith.subf %25, %28 : vector<8x8xf32>
    %30 = math.exp %29 : vector<8x8xf32>
    %cst_12 = arith.constant dense<0.000000e+00> : vector<8xf32>
    %31 = vector.multi_reduction <add>, %30, %cst_12 [1] : vector<8x8xf32> to vector<8xf32>
    %32 = vector.shape_cast %31 : vector<8xf32> to vector<8x1xf32>
    %33 = arith.truncf %30 : vector<8x8xf32> to vector<8x8xbf16>
    %cst_13 = arith.constant dense<0.000000e+00> : vector<8x8xf32>
    %34 = tpu.matmul %33, %21, %cst_13 {dimension_numbers = #tpu.dot_dimension_numbers<[1], [0], [0], [1], [0, 0, 1, 1], [], []>} : vector<8x8xbf16>, vector<8x8xbf16>, vector<8x8xf32> -> vector<8x8xf32>
    %35 = tpu.reciprocal %32 : vector<8x1xf32> -> vector<8x1xf32>
    %36 = vector.broadcast %35 : vector<8x1xf32> to vector<8x8xf32>
    %37 = arith.mulf %34, %36 : vector<8x8xf32>
    %38 = arith.truncf %37 : vector<8x8xf32> to vector<8x8xbf16>
    %39 = vector.extract_strided_slice %14 {offsets = [0, 0], sizes = [8, 32], strides = [1, 1]} : vector<32x32xbf16> to vector<8x32xbf16>
    %cst_14 = arith.constant dense<0.000000e+00> : vector<8x32xf32>
    %40 = tpu.matmul %38, %39, %cst_14 {dimension_numbers = #tpu.dot_dimension_numbers<[1], [0], [0], [1], [0, 0, 1, 1], [], []>} : vector<8x8xbf16>, vector<8x32xbf16>, vector<8x32xf32> -> vector<8x32xf32>
    %41 = arith.addf %15, %40 : vector<8x32xf32>
    %42 = vector.extract_strided_slice %8 {offsets = [0, 8], sizes = [8, 8], strides = [1, 1]} : vector<8x32xf32> to vector<8x8xf32>
    %43 = arith.truncf %42 : vector<8x8xf32> to vector<8x8xbf16>
    %44 = vector.extract_strided_slice %9 {offsets = [0, 8], sizes = [8, 8], strides = [1, 1]} : vector<8x32xf32> to vector<8x8xf32>
    %45 = arith.truncf %44 : vector<8x8xf32> to vector<8x8xbf16>
    %46 = vector.extract_strided_slice %10 {offsets = [0, 8], sizes = [8, 8], strides = [1, 1]} : vector<8x32xf32> to vector<8x8xf32>
    %47 = arith.truncf %46 : vector<8x8xf32> to vector<8x8xbf16>
    %48 = tpu.transpose %45, [1, 0] : vector<8x8xbf16> -> vector<8x8xbf16>
    %cst_15 = arith.constant dense<0.000000e+00> : vector<8x8xf32>
    %49 = tpu.matmul %43, %48, %cst_15 {dimension_numbers = #tpu.dot_dimension_numbers<[1], [0], [0], [1], [0, 0, 1, 1], [], []>} : vector<8x8xbf16>, vector<8x8xbf16>, vector<8x8xf32> -> vector<8x8xf32>
    %cst_16 = arith.constant -1.000000e+30 : f32
    %50 = vector.broadcast %cst_16 : f32 to vector<8x8xf32>
    %51 = arith.select %13, %49, %50 : vector<8x8xi1>, vector<8x8xf32>
    %cst_17 = arith.constant dense<0xFF800000> : vector<8xf32>
    %52 = vector.multi_reduction <maximumf>, %51, %cst_17 [1] : vector<8x8xf32> to vector<8xf32>
    %53 = vector.shape_cast %52 : vector<8xf32> to vector<8x1xf32>
    %54 = vector.broadcast %53 : vector<8x1xf32> to vector<8x8xf32>
    %55 = arith.subf %51, %54 : vector<8x8xf32>
    %56 = math.exp %55 : vector<8x8xf32>
    %cst_18 = arith.constant dense<0.000000e+00> : vector<8xf32>
    %57 = vector.multi_reduction <add>, %56, %cst_18 [1] : vector<8x8xf32> to vector<8xf32>
    %58 = vector.shape_cast %57 : vector<8xf32> to vector<8x1xf32>
    %59 = arith.truncf %56 : vector<8x8xf32> to vector<8x8xbf16>
    %cst_19 = arith.constant dense<0.000000e+00> : vector<8x8xf32>
    %60 = tpu.matmul %59, %47, %cst_19 {dimension_numbers = #tpu.dot_dimension_numbers<[1], [0], [0], [1], [0, 0, 1, 1], [], []>} : vector<8x8xbf16>, vector<8x8xbf16>, vector<8x8xf32> -> vector<8x8xf32>
    %61 = tpu.reciprocal %58 : vector<8x1xf32> -> vector<8x1xf32>
    %62 = vector.broadcast %61 : vector<8x1xf32> to vector<8x8xf32>
    %63 = arith.mulf %60, %62 : vector<8x8xf32>
    %64 = arith.truncf %63 : vector<8x8xf32> to vector<8x8xbf16>
    %65 = vector.extract_strided_slice %14 {offsets = [8, 0], sizes = [8, 32], strides = [1, 1]} : vector<32x32xbf16> to vector<8x32xbf16>
    %cst_20 = arith.constant dense<0.000000e+00> : vector<8x32xf32>
    %66 = tpu.matmul %64, %65, %cst_20 {dimension_numbers = #tpu.dot_dimension_numbers<[1], [0], [0], [1], [0, 0, 1, 1], [], []>} : vector<8x8xbf16>, vector<8x32xbf16>, vector<8x32xf32> -> vector<8x32xf32>
    %67 = arith.addf %41, %66 : vector<8x32xf32>
    %68 = vector.extract_strided_slice %8 {offsets = [0, 16], sizes = [8, 8], strides = [1, 1]} : vector<8x32xf32> to vector<8x8xf32>
    %69 = arith.truncf %68 : vector<8x8xf32> to vector<8x8xbf16>
    %70 = vector.extract_strided_slice %9 {offsets = [0, 16], sizes = [8, 8], strides = [1, 1]} : vector<8x32xf32> to vector<8x8xf32>
    %71 = arith.truncf %70 : vector<8x8xf32> to vector<8x8xbf16>
    %72 = vector.extract_strided_slice %10 {offsets = [0, 16], sizes = [8, 8], strides = [1, 1]} : vector<8x32xf32> to vector<8x8xf32>
    %73 = arith.truncf %72 : vector<8x8xf32> to vector<8x8xbf16>
    %74 = tpu.transpose %71, [1, 0] : vector<8x8xbf16> -> vector<8x8xbf16>
    %cst_21 = arith.constant dense<0.000000e+00> : vector<8x8xf32>
    %75 = tpu.matmul %69, %74, %cst_21 {dimension_numbers = #tpu.dot_dimension_numbers<[1], [0], [0], [1], [0, 0, 1, 1], [], []>} : vector<8x8xbf16>, vector<8x8xbf16>, vector<8x8xf32> -> vector<8x8xf32>
    %cst_22 = arith.constant -1.000000e+30 : f32
    %76 = vector.broadcast %cst_22 : f32 to vector<8x8xf32>
    %77 = arith.select %13, %75, %76 : vector<8x8xi1>, vector<8x8xf32>
    %cst_23 = arith.constant dense<0xFF800000> : vector<8xf32>
    %78 = vector.multi_reduction <maximumf>, %77, %cst_23 [1] : vector<8x8xf32> to vector<8xf32>
    %79 = vector.shape_cast %78 : vector<8xf32> to vector<8x1xf32>
    %80 = vector.broadcast %79 : vector<8x1xf32> to vector<8x8xf32>
    %81 = arith.subf %77, %80 : vector<8x8xf32>
    %82 = math.exp %81 : vector<8x8xf32>
    %cst_24 = arith.constant dense<0.000000e+00> : vector<8xf32>
    %83 = vector.multi_reduction <add>, %82, %cst_24 [1] : vector<8x8xf32> to vector<8xf32>
    %84 = vector.shape_cast %83 : vector<8xf32> to vector<8x1xf32>
    %85 = arith.truncf %82 : vector<8x8xf32> to vector<8x8xbf16>
    %cst_25 = arith.constant dense<0.000000e+00> : vector<8x8xf32>
    %86 = tpu.matmul %85, %73, %cst_25 {dimension_numbers = #tpu.dot_dimension_numbers<[1], [0], [0], [1], [0, 0, 1, 1], [], []>} : vector<8x8xbf16>, vector<8x8xbf16>, vector<8x8xf32> -> vector<8x8xf32>
    %87 = tpu.reciprocal %84 : vector<8x1xf32> -> vector<8x1xf32>
    %88 = vector.broadcast %87 : vector<8x1xf32> to vector<8x8xf32>
    %89 = arith.mulf %86, %88 : vector<8x8xf32>
    %90 = arith.truncf %89 : vector<8x8xf32> to vector<8x8xbf16>
    %91 = vector.extract_strided_slice %14 {offsets = [16, 0], sizes = [8, 32], strides = [1, 1]} : vector<32x32xbf16> to vector<8x32xbf16>
    %cst_26 = arith.constant dense<0.000000e+00> : vector<8x32xf32>
    %92 = tpu.matmul %90, %91, %cst_26 {dimension_numbers = #tpu.dot_dimension_numbers<[1], [0], [0], [1], [0, 0, 1, 1], [], []>} : vector<8x8xbf16>, vector<8x32xbf16>, vector<8x32xf32> -> vector<8x32xf32>
    %93 = arith.addf %67, %92 : vector<8x32xf32>
    %94 = vector.extract_strided_slice %8 {offsets = [0, 24], sizes = [8, 8], strides = [1, 1]} : vector<8x32xf32> to vector<8x8xf32>
    %95 = arith.truncf %94 : vector<8x8xf32> to vector<8x8xbf16>
    %96 = vector.extract_strided_slice %9 {offsets = [0, 24], sizes = [8, 8], strides = [1, 1]} : vector<8x32xf32> to vector<8x8xf32>
    %97 = arith.truncf %96 : vector<8x8xf32> to vector<8x8xbf16>
    %98 = vector.extract_strided_slice %10 {offsets = [0, 24], sizes = [8, 8], strides = [1, 1]} : vector<8x32xf32> to vector<8x8xf32>
    %99 = arith.truncf %98 : vector<8x8xf32> to vector<8x8xbf16>
    %100 = tpu.transpose %97, [1, 0] : vector<8x8xbf16> -> vector<8x8xbf16>
    %cst_27 = arith.constant dense<0.000000e+00> : vector<8x8xf32>
    %101 = tpu.matmul %95, %100, %cst_27 {dimension_numbers = #tpu.dot_dimension_numbers<[1], [0], [0], [1], [0, 0, 1, 1], [], []>} : vector<8x8xbf16>, vector<8x8xbf16>, vector<8x8xf32> -> vector<8x8xf32>
    %cst_28 = arith.constant -1.000000e+30 : f32
    %102 = vector.broadcast %cst_28 : f32 to vector<8x8xf32>
    %103 = arith.select %13, %101, %102 : vector<8x8xi1>, vector<8x8xf32>
    %cst_29 = arith.constant dense<0xFF800000> : vector<8xf32>
    %104 = vector.multi_reduction <maximumf>, %103, %cst_29 [1] : vector<8x8xf32> to vector<8xf32>
    %105 = vector.shape_cast %104 : vector<8xf32> to vector<8x1xf32>
    %106 = vector.broadcast %105 : vector<8x1xf32> to vector<8x8xf32>
    %107 = arith.subf %103, %106 : vector<8x8xf32>
    %108 = math.exp %107 : vector<8x8xf32>
    %cst_30 = arith.constant dense<0.000000e+00> : vector<8xf32>
    %109 = vector.multi_reduction <add>, %108, %cst_30 [1] : vector<8x8xf32> to vector<8xf32>
    %110 = vector.shape_cast %109 : vector<8xf32> to vector<8x1xf32>
    %111 = arith.truncf %108 : vector<8x8xf32> to vector<8x8xbf16>
    %cst_31 = arith.constant dense<0.000000e+00> : vector<8x8xf32>
    %112 = tpu.matmul %111, %99, %cst_31 {dimension_numbers = #tpu.dot_dimension_numbers<[1], [0], [0], [1], [0, 0, 1, 1], [], []>} : vector<8x8xbf16>, vector<8x8xbf16>, vector<8x8xf32> -> vector<8x8xf32>
    %113 = tpu.reciprocal %110 : vector<8x1xf32> -> vector<8x1xf32>
    %114 = vector.broadcast %113 : vector<8x1xf32> to vector<8x8xf32>
    %115 = arith.mulf %112, %114 : vector<8x8xf32>
    %116 = arith.truncf %115 : vector<8x8xf32> to vector<8x8xbf16>
    %117 = vector.extract_strided_slice %14 {offsets = [24, 0], sizes = [8, 32], strides = [1, 1]} : vector<32x32xbf16> to vector<8x32xbf16>
    %cst_32 = arith.constant dense<0.000000e+00> : vector<8x32xf32>
    %118 = tpu.matmul %116, %117, %cst_32 {dimension_numbers = #tpu.dot_dimension_numbers<[1], [0], [0], [1], [0, 0, 1, 1], [], []>} : vector<8x8xbf16>, vector<8x32xbf16>, vector<8x32xf32> -> vector<8x32xf32>
    %119 = arith.addf %93, %118 : vector<8x32xf32>
    %c0_33 = arith.constant 0 : index
    %c0_34 = arith.constant 0 : index
    %120 = vector.load %arg5[%c0_33, %c0_34] : memref<1x32xf32, #tpu.memory_space<vmem>>, vector<1x32xf32>
    %121 = vector.broadcast %120 : vector<1x32xf32> to vector<8x32xf32>
    %122 = arith.addf %119, %121 : vector<8x32xf32>
    %123 = arith.addf %1, %122 : vector<8x32xf32>
    %cst_35 = arith.constant dense<0.000000e+00> : vector<8xf32>
    %124 = vector.multi_reduction <add>, %123, %cst_35 [1] : vector<8x32xf32> to vector<8xf32>
    %125 = vector.shape_cast %124 : vector<8xf32> to vector<8x1xf32>
    %cst_36 = arith.constant 3.200000e+01 : f32
    %126 = vector.broadcast %cst_36 : f32 to vector<8x1xf32>
    %127 = arith.divf %125, %126 : vector<8x1xf32>
    %128 = vector.broadcast %127 : vector<8x1xf32> to vector<8x32xf32>
    %129 = arith.subf %123, %128 : vector<8x32xf32>
    %130 = arith.mulf %129, %129 : vector<8x32xf32>
    %cst_37 = arith.constant dense<0.000000e+00> : vector<8xf32>
    %131 = vector.multi_reduction <add>, %130, %cst_37 [1] : vector<8x32xf32> to vector<8xf32>
    %132 = vector.shape_cast %131 : vector<8xf32> to vector<8x1xf32>
    %cst_38 = arith.constant 3.200000e+01 : f32
    %133 = vector.broadcast %cst_38 : f32 to vector<8x1xf32>
    %134 = arith.divf %132, %133 : vector<8x1xf32>
    %135 = vector.broadcast %127 : vector<8x1xf32> to vector<8x32xf32>
    %136 = arith.subf %123, %135 : vector<8x32xf32>
    %cst_39 = arith.constant 9.99999974E-6 : f32
    %137 = vector.broadcast %cst_39 : f32 to vector<8x1xf32>
    %138 = arith.addf %134, %137 : vector<8x1xf32>
    %139 = math.rsqrt %138 : vector<8x1xf32>
    %140 = vector.broadcast %139 : vector<8x1xf32> to vector<8x32xf32>
    %141 = arith.mulf %136, %140 : vector<8x32xf32>
    %c0_40 = arith.constant 0 : index
    %c0_41 = arith.constant 0 : index
    %142 = vector.load %arg6[%c0_40, %c0_41] : memref<1x32xf32, #tpu.memory_space<vmem>>, vector<1x32xf32>
    %143 = vector.broadcast %142 : vector<1x32xf32> to vector<8x32xf32>
    %144 = arith.mulf %141, %143 : vector<8x32xf32>
    %c0_42 = arith.constant 0 : index
    %c0_43 = arith.constant 0 : index
    %145 = vector.load %arg7[%c0_42, %c0_43] : memref<1x32xf32, #tpu.memory_space<vmem>>, vector<1x32xf32>
    %146 = vector.broadcast %145 : vector<1x32xf32> to vector<8x32xf32>
    %147 = arith.addf %144, %146 : vector<8x32xf32>
    %148 = arith.truncf %147 : vector<8x32xf32> to vector<8x32xbf16>
    %c0_44 = arith.constant 0 : index
    %c0_45 = arith.constant 0 : index
    %149 = vector.load %arg8[%c0_44, %c0_45] : memref<32x64xbf16, #tpu.memory_space<vmem>>, vector<32x64xbf16>
    %cst_46 = arith.constant dense<0.000000e+00> : vector<8x64xf32>
    %150 = tpu.matmul %148, %149, %cst_46 {dimension_numbers = #tpu.dot_dimension_numbers<[1], [0], [0], [1], [0, 0, 1, 1], [], []>} : vector<8x32xbf16>, vector<32x64xbf16>, vector<8x64xf32> -> vector<8x64xf32>
    %c0_47 = arith.constant 0 : index
    %c0_48 = arith.constant 0 : index
    %151 = vector.load %arg9[%c0_47, %c0_48] : memref<1x64xf32, #tpu.memory_space<vmem>>, vector<1x64xf32>
    %152 = vector.broadcast %151 : vector<1x64xf32> to vector<8x64xf32>
    %153 = arith.addf %150, %152 : vector<8x64xf32>
    %cst_49 = arith.constant 0.000000e+00 : f32
    %154 = vector.broadcast %cst_49 : f32 to vector<8x64xf32>
    %155 = arith.maximumf %153, %154 : vector<8x64xf32>
    %156 = arith.truncf %155 : vector<8x64xf32> to vector<8x64xbf16>
    %c0_50 = arith.constant 0 : index
    %c0_51 = arith.constant 0 : index
    %157 = vector.load %arg10[%c0_50, %c0_51] : memref<64x32xbf16, #tpu.memory_space<vmem>>, vector<64x32xbf16>
    %cst_52 = arith.constant dense<0.000000e+00> : vector<8x32xf32>
    %158 = tpu.matmul %156, %157, %cst_52 {dimension_numbers = #tpu.dot_dimension_numbers<[1], [0], [0], [1], [0, 0, 1, 1], [], []>} : vector<8x64xbf16>, vector<64x32xbf16>, vector<8x32xf32> -> vector<8x32xf32>
    %c0_53 = arith.constant 0 : index
    %c0_54 = arith.constant 0 : index
    %159 = vector.load %arg11[%c0_53, %c0_54] : memref<1x32xf32, #tpu.memory_space<vmem>>, vector<1x32xf32>
    %160 = vector.broadcast %159 : vector<1x32xf32> to vector<8x32xf32>
    %161 = arith.addf %158, %160 : vector<8x32xf32>
    %162 = arith.addf %147, %161 : vector<8x32xf32>
    %cst_55 = arith.constant dense<0.000000e+00> : vector<8xf32>
    %163 = vector.multi_reduction <add>, %162, %cst_55 [1] : vector<8x32xf32> to vector<8xf32>
    %164 = vector.shape_cast %163 : vector<8xf32> to vector<8x1xf32>
    %cst_56 = arith.constant 3.200000e+01 : f32
    %165 = vector.broadcast %cst_56 : f32 to vector<8x1xf32>
    %166 = arith.divf %164, %165 : vector<8x1xf32>
    %167 = vector.broadcast %166 : vector<8x1xf32> to vector<8x32xf32>
    %168 = arith.subf %162, %167 : vector<8x32xf32>
    %169 = arith.mulf %168, %168 : vector<8x32xf32>
    %cst_57 = arith.constant dense<0.000000e+00> : vector<8xf32>
    %170 = vector.multi_reduction <add>, %169, %cst_57 [1] : vector<8x32xf32> to vector<8xf32>
    %171 = vector.shape_cast %170 : vector<8xf32> to vector<8x1xf32>
    %cst_58 = arith.constant 3.200000e+01 : f32
    %172 = vector.broadcast %cst_58 : f32 to vector<8x1xf32>
    %173 = arith.divf %171, %172 : vector<8x1xf32>
    %174 = vector.broadcast %166 : vector<8x1xf32> to vector<8x32xf32>
    %175 = arith.subf %162, %174 : vector<8x32xf32>
    %cst_59 = arith.constant 9.99999974E-6 : f32
    %176 = vector.broadcast %cst_59 : f32 to vector<8x1xf32>
    %177 = arith.addf %173, %176 : vector<8x1xf32>
    %178 = math.rsqrt %177 : vector<8x1xf32>
    %179 = vector.broadcast %178 : vector<8x1xf32> to vector<8x32xf32>
    %180 = arith.mulf %175, %179 : vector<8x32xf32>
    %c0_60 = arith.constant 0 : index
    %c0_61 = arith.constant 0 : index
    %181 = vector.load %arg12[%c0_60, %c0_61] : memref<1x32xf32, #tpu.memory_space<vmem>>, vector<1x32xf32>
    %182 = vector.broadcast %181 : vector<1x32xf32> to vector<8x32xf32>
    %183 = arith.mulf %180, %182 : vector<8x32xf32>
    %c0_62 = arith.constant 0 : index
    %c0_63 = arith.constant 0 : index
    %184 = vector.load %arg13[%c0_62, %c0_63] : memref<1x32xf32, #tpu.memory_space<vmem>>, vector<1x32xf32>
    %185 = vector.broadcast %184 : vector<1x32xf32> to vector<8x32xf32>
    %186 = arith.addf %183, %185 : vector<8x32xf32>
    %c0_64 = arith.constant 0 : index
    %c0_65 = arith.constant 0 : index
    %c0_66 = arith.constant 0 : index
    %187 = vector.load %arg14[%c0_64, %c0_65, %c0_66] : memref<1x8x32xf32, #tpu.memory_space<vmem>>, vector<1x8x32xf32>
    %188 = vector.shape_cast %187 : vector<1x8x32xf32> to vector<8x32xf32>
    %189 = vector.shape_cast %186 : vector<8x32xf32> to vector<1x8x32xf32>
    tpu.vector_store %arg14[%c0_64, %c0_65, %c0_66], %189 {strides = array<i32>} : memref<1x8x32xf32, #tpu.memory_space<vmem>>, vector<1x8x32xf32>,
    return
  }
  func.func @transform_0(%arg0: i32) -> (i32, i32, i32) {
    %c0_i32 = arith.constant 0 : i32
    %c0_i32_0 = arith.constant 0 : i32
    %c0_i32_1 = arith.constant 0 : i32
    return %arg0, %c0_i32, %c0_i32_0 : i32, i32, i32
  }
  func.func @transform_1(%arg0: i32) -> (i32, i32) {
    %c0_i32 = arith.constant 0 : i32
    %c0_i32_0 = arith.constant 0 : i32
    %c0_i32_1 = arith.constant 0 : i32
    return %c0_i32, %c0_i32_0 : i32, i32
  }
  func.func @transform_2(%arg0: i32) -> (i32, i32) {
    %c0_i32 = arith.constant 0 : i32
    %c0_i32_0 = arith.constant 0 : i32
    %c0_i32_1 = arith.constant 0 : i32
    return %c0_i32, %c0_i32_0 : i32, i32
  }
  func.func @transform_3(%arg0: i32) -> (i32, i32) {
    %c0_i32 = arith.constant 0 : i32
    %c0_i32_0 = arith.constant 0 : i32
    %c0_i32_1 = arith.constant 0 : i32
    return %c0_i32, %c0_i32_0 : i32, i32
  }
  func.func @transform_4(%arg0: i32) -> (i32, i32) {
    %c0_i32 = arith.constant 0 : i32
    %c0_i32_0 = arith.constant 0 : i32
    %c0_i32_1 = arith.constant 0 : i32
    return %c0_i32, %c0_i32_0 : i32, i32
  }
  func.func @transform_5(%arg0: i32) -> (i32, i32) {
    %c0_i32 = arith.constant 0 : i32
    %c0_i32_0 = arith.constant 0 : i32
    %c0_i32_1 = arith.constant 0 : i32
    return %c0_i32, %c0_i32_0 : i32, i32
  }
  func.func @transform_6(%arg0: i32) -> (i32, i32) {
    %c0_i32 = arith.constant 0 : i32
    %c0_i32_0 = arith.constant 0 : i32
    %c0_i32_1 = arith.constant 0 : i32
    return %c0_i32, %c0_i32_0 : i32, i32
  }
  func.func @transform_7(%arg0: i32) -> (i32, i32) {
    %c0_i32 = arith.constant 0 : i32
    %c0_i32_0 = arith.constant 0 : i32
    %c0_i32_1 = arith.constant 0 : i32
    return %c0_i32, %c0_i32_0 : i32, i32
  }
  func.func @transform_8(%arg0: i32) -> (i32, i32) {
    %c0_i32 = arith.constant 0 : i32
    %c0_i32_0 = arith.constant 0 : i32
    %c0_i32_1 = arith.constant 0 : i32
    return %c0_i32, %c0_i32_0 : i32, i32
  }
  func.func @transform_9(%arg0: i32) -> (i32, i32) {
    %c0_i32 = arith.constant 0 : i32
    %c0_i32_0 = arith.constant 0 : i32
    %c0_i32_1 = arith.constant 0 : i32
    return %c0_i32, %c0_i32_0 : i32, i32
  }
  func.func @transform_10(%arg0: i32) -> (i32, i32) {
    %c0_i32 = arith.constant 0 : i32
    %c0_i32_0 = arith.constant 0 : i32
    %c0_i32_1 = arith.constant 0 : i32
    return %c0_i32, %c0_i32_0 : i32, i32
  }
  func.func @transform_11(%arg0: i32) -> (i32, i32) {
    %c0_i32 = arith.constant 0 : i32
    %c0_i32_0 = arith.constant 0 : i32
    %c0_i32_1 = arith.constant 0 : i32
    return %c0_i32, %c0_i32_0 : i32, i32
  }
  func.func @transform_12(%arg0: i32) -> (i32, i32) {
    %c0_i32 = arith.constant 0 : i32
    %c0_i32_0 = arith.constant 0 : i32
    %c0_i32_1 = arith.constant 0 : i32
    return %c0_i32, %c0_i32_0 : i32, i32
  }
  func.func @transform_13(%arg0: i32) -> (i32, i32, i32) {
    %c0_i32 = arith.constant 0 : i32
    %c0_i32_0 = arith.constant 0 : i32
    %c0_i32_1 = arith.constant 0 : i32
    return %arg0, %c0_i32, %c0_i32_0 : i32, i32, i32
  }
}

</mosaic_0001>

<llo_original>
// kernel: decoder_layer.1
$region0: #{decoder_layer.1}
  #allocation0 [shape = 'u32[]', space=smem, size = 0x4, offset = 0x4, fixed_abs, tag = 'smem constant byte address 0x4 - core index']
  #allocation1 [shape = 'u32[72,128]{1,0:T(1,128)}', space=vmem, size = 0x9000, scoped, tag = 'internal scratch']
  %s0 = inlined_call_operand.vmem [shape: f32[2,8,32], index: 0, kind: input, shape index: {}]
  %s1 = inlined_call_operand.vmem [shape: bf16[32,96], index: 1, kind: input, shape index: {}]
  %s2 = inlined_call_operand.vmem [shape: f32[1,96], index: 2, kind: input, shape index: {}]
  %s3 = inlined_call_operand.vmem [shape: bf16[32,32], index: 3, kind: input, shape index: {}]
  %s4 = inlined_call_operand.vmem [shape: f32[1,32], index: 4, kind: input, shape index: {}]
  %s5 = inlined_call_operand.vmem [shape: f32[1,32], index: 5, kind: input, shape index: {}]
  %s6 = inlined_call_operand.hbm [shape: f32[1,32], index: 6, kind: input, shape index: {}]
  %s7 = inlined_call_operand.hbm [shape: bf16[32,64], index: 7, kind: input, shape index: {}]
  %s8 = inlined_call_operand.vmem [shape: f32[1,64], index: 8, kind: input, shape index: {}]
  %s9 = inlined_call_operand.vmem [shape: bf16[64,32], index: 9, kind: input, shape index: {}]
  %s10 = inlined_call_operand.vmem [shape: f32[1,32], index: 10, kind: input, shape index: {}]
  %s11 = inlined_call_operand.vmem [shape: f32[1,32], index: 11, kind: input, shape index: {}]
  %s12 = inlined_call_operand.hbm [shape: f32[1,32], index: 12, kind: input, shape index: {}]
  %s13 = inlined_call_operand.hbm [shape: f32[2,8,32], index: 13, kind: output, shape index: {}]
  %s14 = sld [smem:[#allocation0]]
  $region97: #{decoder_layer.1} parent=0
    _
  %s16 = ssub.s32 1, %s14
  %s17 = scalar_select 0, %s16, %s14
  $region1: #{decoder_layer.1} parent=0
    #allocation2 [shape = 'u8[512]{0}', space=vmem, size = 0x400, scoped, tag = 'input window, operand 6, single buffered']
    #allocation3 [shape = 's32[2]{0}', space=sflag, size = 0x8, scoped, tag = 'scoped memory for decoder_layer.1']
    #allocation4 [shape = 's32[2]{0}', space=sflag, size = 0x8, scoped, tag = 'scoped memory for decoder_layer.1']
    #allocation5 [shape = 'u8[8192]{0}', space=vmem, size = 0x2000, scoped, tag = 'input window, operand 7, single buffered']
    #allocation6 [shape = 's32[1]{0}', space=sflag, size = 0x4, scoped, tag = 'scoped memory for decoder_layer.1']
    #allocation7 [shape = 'u8[512]{0}', space=vmem, size = 0x400, scoped, tag = 'input window, operand 12, single buffered']
    #allocation8 [shape = 'u8[8192]{0}', space=vmem, size = 0x2000, scoped, tag = 'output window, operand 0']
    %18 = vsyncpa [#allocation3], 0
    %19 = vsyncpa [#allocation6], 0
    %20 = vsyncpa [#allocation4], 0
    %s21 = scalar_lea.sflag [#allocation4], 1
    %22 = vsyncpa %s21, 0
    loop: start=0, step=1, limit=4
    $region2: #{decoder_layer.1} parent=1 // loop_pre_header
      _
    $region3: #{decoder_layer.1} parent=1 // loop_header
      %s24 = sphi 0, %s28
      %p25 = scmp.ge.s32.totalorder %s24, 4
      %s34 = sphi 0, %s36
      %s37 = sphi 0, %s34
      %s38 = sphi 0, %s37
      %s54 = sphi 0, %s38
      %s58 = sphi 0, %s58
      %s60 = sphi 0, %s58
      %s61 = sphi 0, %s60
      %s75 = sphi 0, %s61
      %s79 = sphi 0, %s79
      %s81 = sphi 0, %s79
      %s82 = sphi 0, %s81
      %s96 = sphi 0, %s82
      %s100 = sphi 0, %s100
      %s102 = sphi 0, %s100
      %s103 = sphi 0, %s102
      %s117 = sphi 0, %s103
      %s121 = sphi 0, %s121
      %s123 = sphi 0, %s121
      %s124 = sphi 0, %s123
      %s138 = sphi 0, %s124
      %s142 = sphi 0, %s142
      %s144 = sphi 0, %s142
      %s145 = sphi 0, %s144
      %s159 = sphi 0, %s145
      %s163 = sphi 0, %s163
      %s165 = sphi 0, %s163
      %s166 = sphi 0, %s165
      %s180 = sphi 0, %s166
      %s184 = sphi 0, %s184
      %s186 = sphi 0, %s184
      %s187 = sphi 0, %s186
      %s201 = sphi 0, %s187
      %s205 = sphi 0, %s205
      %s207 = sphi 0, %s205
      %s208 = sphi 0, %s207
      %s222 = sphi 0, %s208
      %s226 = sphi 0, %s226
      %s228 = sphi 0, %s226
      %s229 = sphi 0, %s228
      %s243 = sphi 0, %s229
      %s247 = sphi 0, %s247
      %s249 = sphi 0, %s247
      %s250 = sphi 0, %s249
      %s264 = sphi 0, %s250
      %s268 = sphi 0, %s268
      %s270 = sphi 0, %s268
      %s271 = sphi 0, %s270
      %s285 = sphi 0, %s271
      %s289 = sphi 0, %s289
      %s291 = sphi 0, %s289
      %s292 = sphi 0, %s291
      %s306 = sphi 0, %s292
      %s312 = sphi 0, %s314
      %s315 = sphi 0, %s312
      %s316 = sphi 0, %s315
      %s332 = sphi 0, %s316
    $region4: #{decoder_layer.1} parent=1 // loop_header_branch
      %27 = sbr.rel (%p25) target = $region8
    $region5: #{decoder_layer.1} parent=1 // loop_body
      %s29 = ssub.s32 %s24, 1
      %s30 = ssub.s32 %s24, 2
      %s31 = sadd.s32 %s24, 1
      %s32 = ssub.s32 %s24, %s31
      %p33 = scmp.eq.s32.totalorder %s32, 0
      %s35 = sadd.s32 %s34, 1
      %s36 = scalar_select %p33, %s34, %s35
      %p39 = pneg %p33
      %p40 = scmp.eq.s32.totalorder %s24, 1
      %p41 = por %p39, %p40
      %p42 = scmp.ne.s32.totalorder %s34, %s37
      %p43 = scmp.eq.s32.totalorder %s24, 0
      %p44 = por %p42, %p43
      %p45 = scmp.ne.s32.totalorder %s34, %s37
      %p46 = scmp.eq.s32.totalorder %s29, 1
      %p47 = por %p45, %p46
      %p48 = scmp.ne.s32.totalorder %s37, %s38
      %p49 = scmp.eq.s32.totalorder %s29, 0
      %p50 = por %p48, %p49
      %p51 = scmp.ne.s32.totalorder %s37, %s38
      %p52 = scmp.eq.s32.totalorder %s30, 1
      %p53 = por %p51, %p52
      %p55 = scmp.ne.s32.totalorder %s38, %s54
      %p56 = scmp.eq.s32.totalorder %s30, 0
      %p57 = por %p55, %p56
      %s59 = sadd.s32 %s58, 1
      %p62 = scmp.eq.s32.totalorder %s24, 1
      %p63 = scmp.ne.s32.totalorder %s58, %s60
      %p64 = scmp.eq.s32.totalorder %s24, 0
      %p65 = por %p63, %p64
      %p66 = scmp.ne.s32.totalorder %s58, %s60
      %p67 = scmp.eq.s32.totalorder %s29, 1
      %p68 = por %p66, %p67
      %p69 = scmp.ne.s32.totalorder %s60, %s61
      %p70 = scmp.eq.s32.totalorder %s29, 0
      %p71 = por %p69, %p70
      %p72 = scmp.ne.s32.totalorder %s60, %s61
      %p73 = scmp.eq.s32.totalorder %s30, 1
      %p74 = por %p72, %p73
      %p76 = scmp.ne.s32.totalorder %s61, %s75
      %p77 = scmp.eq.s32.totalorder %s30, 0
      %p78 = por %p76, %p77
      %s80 = sadd.s32 %s79, 1
      %p83 = scmp.eq.s32.totalorder %s24, 1
      %p84 = scmp.ne.s32.totalorder %s79, %s81
      %p85 = scmp.eq.s32.totalorder %s24, 0
      %p86 = por %p84, %p85
      %p87 = scmp.ne.s32.totalorder %s79, %s81
      %p88 = scmp.eq.s32.totalorder %s29, 1
      %p89 = por %p87, %p88
      %p90 = scmp.ne.s32.totalorder %s81, %s82
      %p91 = scmp.eq.s32.totalorder %s29, 0
      %p92 = por %p90, %p91
      %p93 = scmp.ne.s32.totalorder %s81, %s82
      %p94 = scmp.eq.s32.totalorder %s30, 1
      %p95 = por %p93, %p94
      %p97 = scmp.ne.s32.totalorder %s82, %s96
      %p98 = scmp.eq.s32.totalorder %s30, 0
      %p99 = por %p97, %p98
      %s101 = sadd.s32 %s100, 1
      %p104 = scmp.eq.s32.totalorder %s24, 1
      %p105 = scmp.ne.s32.totalorder %s100, %s102
      %p106 = scmp.eq.s32.totalorder %s24, 0
      %p107 = por %p105, %p106
      %p108 = scmp.ne.s32.totalorder %s100, %s102
      %p109 = scmp.eq.s32.totalorder %s29, 1
      %p110 = por %p108, %p109
      %p111 = scmp.ne.s32.totalorder %s102, %s103
      %p112 = scmp.eq.s32.totalorder %s29, 0
      %p113 = por %p111, %p112
      %p114 = scmp.ne.s32.totalorder %s102, %s103
      %p115 = scmp.eq.s32.totalorder %s30, 1
      %p116 = por %p114, %p115
      %p118 = scmp.ne.s32.totalorder %s103, %s117
      %p119 = scmp.eq.s32.totalorder %s30, 0
      %p120 = por %p118, %p119
      %s122 = sadd.s32 %s121, 1
      %p125 = scmp.eq.s32.totalorder %s24, 1
      %p126 = scmp.ne.s32.totalorder %s121, %s123
      %p127 = scmp.eq.s32.totalorder %s24, 0
      %p128 = por %p126, %p127
      %p129 = scmp.ne.s32.totalorder %s121, %s123
      %p130 = scmp.eq.s32.totalorder %s29, 1
      %p131 = por %p129, %p130
      %p132 = scmp.ne.s32.totalorder %s123, %s124
      %p133 = scmp.eq.s32.totalorder %s29, 0
      %p134 = por %p132, %p133
      %p135 = scmp.ne.s32.totalorder %s123, %s124
      %p136 = scmp.eq.s32.totalorder %s30, 1
      %p137 = por %p135, %p136
      %p139 = scmp.ne.s32.totalorder %s124, %s138
      %p140 = scmp.eq.s32.totalorder %s30, 0
      %p141 = por %p139, %p140
      %s143 = sadd.s32 %s142, 1
      %p146 = scmp.eq.s32.totalorder %s24, 1
      %p147 = scmp.ne.s32.totalorder %s142, %s144
      %p148 = scmp.eq.s32.totalorder %s24, 0
      %p149 = por %p147, %p148
      %p150 = scmp.ne.s32.totalorder %s142, %s144
      %p151 = scmp.eq.s32.totalorder %s29, 1
      %p152 = por %p150, %p151
      %p153 = scmp.ne.s32.totalorder %s144, %s145
      %p154 = scmp.eq.s32.totalorder %s29, 0
      %p155 = por %p153, %p154
      %p156 = scmp.ne.s32.totalorder %s144, %s145
      %p157 = scmp.eq.s32.totalorder %s30, 1
      %p158 = por %p156, %p157
      %p160 = scmp.ne.s32.totalorder %s145, %s159
      %p161 = scmp.eq.s32.totalorder %s30, 0
      %p162 = por %p160, %p161
      %s164 = sadd.s32 %s163, 1
      %p167 = scmp.eq.s32.totalorder %s24, 1
      %p168 = scmp.ne.s32.totalorder %s163, %s165
      %p169 = scmp.eq.s32.totalorder %s24, 0
      %p170 = por %p168, %p169
      %p171 = scmp.ne.s32.totalorder %s163, %s165
      %p172 = scmp.eq.s32.totalorder %s29, 1
      %p173 = por %p171, %p172
      %p174 = scmp.ne.s32.totalorder %s165, %s166
      %p175 = scmp.eq.s32.totalorder %s29, 0
      %p176 = por %p174, %p175
      %p177 = scmp.ne.s32.totalorder %s165, %s166
      %p178 = scmp.eq.s32.totalorder %s30, 1
      %p179 = por %p177, %p178
      %p181 = scmp.ne.s32.totalorder %s166, %s180
      %p182 = scmp.eq.s32.totalorder %s30, 0
      %p183 = por %p181, %p182
      %s185 = sadd.s32 %s184, 1
      %p188 = scmp.eq.s32.totalorder %s24, 1
      %p189 = scmp.ne.s32.totalorder %s184, %s186
      %p190 = scmp.eq.s32.totalorder %s24, 0
      %p191 = por %p189, %p190
      %p192 = scmp.ne.s32.totalorder %s184, %s186
      %p193 = scmp.eq.s32.totalorder %s29, 1
      %p194 = por %p192, %p193
      %p195 = scmp.ne.s32.totalorder %s186, %s187
      %p196 = scmp.eq.s32.totalorder %s29, 0
      %p197 = por %p195, %p196
      %p198 = scmp.ne.s32.totalorder %s186, %s187
      %p199 = scmp.eq.s32.totalorder %s30, 1
      %p200 = por %p198, %p199
      %p202 = scmp.ne.s32.totalorder %s187, %s201
      %p203 = scmp.eq.s32.totalorder %s30, 0
      %p204 = por %p202, %p203
      %s206 = sadd.s32 %s205, 1
      %p209 = scmp.eq.s32.totalorder %s24, 1
      %p210 = scmp.ne.s32.totalorder %s205, %s207
      %p211 = scmp.eq.s32.totalorder %s24, 0
      %p212 = por %p210, %p211
      %p213 = scmp.ne.s32.totalorder %s205, %s207
      %p214 = scmp.eq.s32.totalorder %s29, 1
      %p215 = por %p213, %p214
      %p216 = scmp.ne.s32.totalorder %s207, %s208
      %p217 = scmp.eq.s32.totalorder %s29, 0
      %p218 = por %p216, %p217
      %p219 = scmp.ne.s32.totalorder %s207, %s208
      %p220 = scmp.eq.s32.totalorder %s30, 1
      %p221 = por %p219, %p220
      %p223 = scmp.ne.s32.totalorder %s208, %s222
      %p224 = scmp.eq.s32.totalorder %s30, 0
      %p225 = por %p223, %p224
      %s227 = sadd.s32 %s226, 1
      %p230 = scmp.eq.s32.totalorder %s24, 1
      %p231 = scmp.ne.s32.totalorder %s226, %s228
      %p232 = scmp.eq.s32.totalorder %s24, 0
      %p233 = por %p231, %p232
      %p234 = scmp.ne.s32.totalorder %s226, %s228
      %p235 = scmp.eq.s32.totalorder %s29, 1
      %p236 = por %p234, %p235
      %p237 = scmp.ne.s32.totalorder %s228, %s229
      %p238 = scmp.eq.s32.totalorder %s29, 0
      %p239 = por %p237, %p238
      %p240 = scmp.ne.s32.totalorder %s228, %s229
      %p241 = scmp.eq.s32.totalorder %s30, 1
      %p242 = por %p240, %p241
      %p244 = scmp.ne.s32.totalorder %s229, %s243
      %p245 = scmp.eq.s32.totalorder %s30, 0
      %p246 = por %p244, %p245
      %s248 = sadd.s32 %s247, 1
      %p251 = scmp.eq.s32.totalorder %s24, 1
      %p252 = scmp.ne.s32.totalorder %s247, %s249
      %p253 = scmp.eq.s32.totalorder %s24, 0
      %p254 = por %p252, %p253
      %p255 = scmp.ne.s32.totalorder %s247, %s249
      %p256 = scmp.eq.s32.totalorder %s29, 1
      %p257 = por %p255, %p256
      %p258 = scmp.ne.s32.totalorder %s249, %s250
      %p259 = scmp.eq.s32.totalorder %s29, 0
      %p260 = por %p258, %p259
      %p261 = scmp.ne.s32.totalorder %s249, %s250
      %p262 = scmp.eq.s32.totalorder %s30, 1
      %p263 = por %p261, %p262
      %p265 = scmp.ne.s32.totalorder %s250, %s264
      %p266 = scmp.eq.s32.totalorder %s30, 0
      %p267 = por %p265, %p266
      %s269 = sadd.s32 %s268, 1
      %p272 = scmp.eq.s32.totalorder %s24, 1
      %p273 = scmp.ne.s32.totalorder %s268, %s270
      %p274 = scmp.eq.s32.totalorder %s24, 0
      %p275 = por %p273, %p274
      %p276 = scmp.ne.s32.totalorder %s268, %s270
      %p277 = scmp.eq.s32.totalorder %s29, 1
      %p278 = por %p276, %p277
      %p279 = scmp.ne.s32.totalorder %s270, %s271
      %p280 = scmp.eq.s32.totalorder %s29, 0
      %p281 = por %p279, %p280
      %p282 = scmp.ne.s32.totalorder %s270, %s271
      %p283 = scmp.eq.s32.totalorder %s30, 1
      %p284 = por %p282, %p283
      %p286 = scmp.ne.s32.totalorder %s271, %s285
      %p287 = scmp.eq.s32.totalorder %s30, 0
      %p288 = por %p286, %p287
      %s290 = sadd.s32 %s289, 1
      %p293 = scmp.eq.s32.totalorder %s24, 1
      %p294 = scmp.ne.s32.totalorder %s289, %s291
      %p295 = scmp.eq.s32.totalorder %s24, 0
      %p296 = por %p294, %p295
      %p297 = scmp.ne.s32.totalorder %s289, %s291
      %p298 = scmp.eq.s32.totalorder %s29, 1
      %p299 = por %p297, %p298
      %p300 = scmp.ne.s32.totalorder %s291, %s292
      %p301 = scmp.eq.s32.totalorder %s29, 0
      %p302 = por %p300, %p301
      %p303 = scmp.ne.s32.totalorder %s291, %s292
      %p304 = scmp.eq.s32.totalorder %s30, 1
      %p305 = por %p303, %p304
      %p307 = scmp.ne.s32.totalorder %s292, %s306
      %p308 = scmp.eq.s32.totalorder %s30, 0
      %p309 = por %p307, %p308
      %s310 = ssub.s32 %s24, %s31
      %p311 = scmp.eq.s32.totalorder %s310, 0
      %s313 = sadd.s32 %s312, 1
      %s314 = scalar_select %p311, %s312, %s313
      %p317 = pneg %p311
      %p318 = scmp.eq.s32.totalorder %s24, 1
      %p319 = por %p317, %p318
      %p320 = scmp.ne.s32.totalorder %s312, %s315
      %p321 = scmp.eq.s32.totalorder %s24, 0
      %p322 = por %p320, %p321
      %p323 = scmp.ne.s32.totalorder %s312, %s315
      %p324 = scmp.eq.s32.totalorder %s29, 1
      %p325 = por %p323, %p324
      %p326 = scmp.ne.s32.totalorder %s315, %s316
      %p327 = scmp.eq.s32.totalorder %s29, 0
      %p328 = por %p326, %p327
      %p329 = scmp.ne.s32.totalorder %s315, %s316
      %p330 = scmp.eq.s32.totalorder %s30, 1
      %p331 = por %p329, %p330
      %p333 = scmp.ne.s32.totalorder %s316, %s332
      %p334 = scmp.eq.s32.totalorder %s30, 0
      %p335 = por %p333, %p334
      %p336 = scmp.le.s32.totalorder 1, %s24
      %p337 = scmp.lt.s32.totalorder %s24, 3
      %p338 = pnand %p336, %p337
      %p339 = pneg %p338
      // Predicated region
      $region9: #{decoder_layer.1} parent=5 // pred_check
        _
      $region10: #{decoder_layer.1} parent=5 // pred_check_branch
        %341 = sbr.rel (%p338) target = $region12
      $region11: #{decoder_layer.1} parent=5 // pred_region
        %s342 = ssub.s32 %s24, 1
        // Predicated region
        $region13: #{decoder_layer.1} parent=11 // pred_check
          %p343 = pneg %p71
        $region14: #{decoder_layer.1} parent=11 // pred_check_branch
          %345 = sbr.rel (%p343) target = $region16
        $region15: #{decoder_layer.1} parent=11 // pred_region
          _
        $region16: #{decoder_layer.1} parent=11 // pred_fallthru
          _
        // Predicated region
        $region17: #{decoder_layer.1} parent=11 // pred_check
          %p346 = pneg %p92
        $region18: #{decoder_layer.1} parent=11 // pred_check_branch
          %348 = sbr.rel (%p346) target = $region20
        $region19: #{decoder_layer.1} parent=11 // pred_region
          _
        $region20: #{decoder_layer.1} parent=11 // pred_fallthru
          _
        // Predicated region
        $region21: #{decoder_layer.1} parent=11 // pred_check
          %p349 = pneg %p113
        $region22: #{decoder_layer.1} parent=11 // pred_check_branch
          %351 = sbr.rel (%p349) target = $region24
        $region23: #{decoder_layer.1} parent=11 // pred_region
          _
        $region24: #{decoder_layer.1} parent=11 // pred_fallthru
          _
        // Predicated region
        $region25: #{decoder_layer.1} parent=11 // pred_check
          %p352 = pneg %p134
        $region26: #{decoder_layer.1} parent=11 // pred_check_branch
          %354 = sbr.rel (%p352) target = $region28
        $region27: #{decoder_layer.1} parent=11 // pred_region
          _
        $region28: #{decoder_layer.1} parent=11 // pred_fallthru
          _
        // Predicated region
        $region29: #{decoder_layer.1} parent=11 // pred_check
          %p355 = pneg %p155
        $region30: #{decoder_layer.1} parent=11 // pred_check_branch
          %357 = sbr.rel (%p355) target = $region32
        $region31: #{decoder_layer.1} parent=11 // pred_region
          _
        $region32: #{decoder_layer.1} parent=11 // pred_fallthru
          _
        // Predicated region
        $region33: #{decoder_layer.1} parent=11 // pred_check
          %p358 = pneg %p176
        $region34: #{decoder_layer.1} parent=11 // pred_check_branch
          %360 = sbr.rel (%p358) target = $region36
        $region35: #{decoder_layer.1} parent=11 // pred_region
          %362 = vsyncadd [#allocation3], 0
          %s364 = sshll.u32 %s6, 4
          %s365 = int_to_ptr.hbm [resolvable:$true] %s364
          %s366 = sshll.u32 [#allocation2], 4
          %s367 = int_to_ptr.vmem [resolvable:$true] %s366
          %369 = dma.hbm_to_vmem [thread:$0]  %s365, 16, %s367, [#allocation3]
        $region36: #{decoder_layer.1} parent=11 // pred_fallthru
          _
        // Predicated region
        $region37: #{decoder_layer.1} parent=11 // pred_check
          %p370 = pneg %p197
        $region38: #{decoder_layer.1} parent=11 // pred_check_branch
          %372 = sbr.rel (%p370) target = $region40
        $region39: #{decoder_layer.1} parent=11 // pred_region
          %374 = vsyncadd [#allocation6], 0
          %s375 = sshll.u32 %s7, 4
          %s376 = int_to_ptr.hbm [resolvable:$true] %s375
          %s377 = sshll.u32 [#allocation5], 4
          %s378 = int_to_ptr.vmem [resolvable:$true] %s377
          %383 = dma.hbm_to_vmem [thread:$0]  %s376, 256, %s378, [#allocation6], 64, 64, 4
        $region40: #{decoder_layer.1} parent=11 // pred_fallthru
          _
        // Predicated region
        $region41: #{decoder_layer.1} parent=11 // pred_check
          %p384 = pneg %p218
        $region42: #{decoder_layer.1} parent=11 // pred_check_branch
          %386 = sbr.rel (%p384) target = $region44
        $region43: #{decoder_layer.1} parent=11 // pred_region
          _
        $region44: #{decoder_layer.1} parent=11 // pred_fallthru
          _
        // Predicated region
        $region45: #{decoder_layer.1} parent=11 // pred_check
          %p387 = pneg %p239
        $region46: #{decoder_layer.1} parent=11 // pred_check_branch
          %389 = sbr.rel (%p387) target = $region48
        $region47: #{decoder_layer.1} parent=11 // pred_region
          _
        $region48: #{decoder_layer.1} parent=11 // pred_fallthru
          _
        // Predicated region
        $region49: #{decoder_layer.1} parent=11 // pred_check
          %p390 = pneg %p260
        $region50: #{decoder_layer.1} parent=11 // pred_check_branch
          %392 = sbr.rel (%p390) target = $region52
        $region51: #{decoder_layer.1} parent=11 // pred_region
          _
        $region52: #{decoder_layer.1} parent=11 // pred_fallthru
          _
        // Predicated region
        $region53: #{decoder_layer.1} parent=11 // pred_check
          %p393 = pneg %p281
        $region54: #{decoder_layer.1} parent=11 // pred_check_branch
          %395 = sbr.rel (%p393) target = $region56
        $region55: #{decoder_layer.1} parent=11 // pred_region
          _
        $region56: #{decoder_layer.1} parent=11 // pred_fallthru
          _
        // Predicated region
        $region57: #{decoder_layer.1} parent=11 // pred_check
          %p396 = pneg %p302
        $region58: #{decoder_layer.1} parent=11 // pred_check_branch
          %398 = sbr.rel (%p396) target = $region60
        $region59: #{decoder_layer.1} parent=11 // pred_region
          %400 = vsyncadd [#allocation6], 0
          %s402 = sshll.u32 %s12, 4
          %s403 = int_to_ptr.hbm [resolvable:$true] %s402
          %s404 = sshll.u32 [#allocation7], 4
          %s405 = int_to_ptr.vmem [resolvable:$true] %s404
          %407 = dma.hbm_to_vmem [thread:$0]  %s403, 16, %s405, [#allocation6]
        $region60: #{decoder_layer.1} parent=11 // pred_fallthru
          _
      $region12: #{decoder_layer.1} parent=5 // pred_fallthru
        _
      %p408 = scmp.lt.s32.totalorder %s24, 2
      // Predicated region
      $region61: #{decoder_layer.1} parent=5 // pred_check
        %p409 = pneg %p408
      $region62: #{decoder_layer.1} parent=5 // pred_check_branch
        %411 = sbr.rel (%p409) target = $region64
      $region63: #{decoder_layer.1} parent=5 // pred_region
        // Predicated region
        $region65: #{decoder_layer.1} parent=63 // pred_check
          %p412 = pneg %p44
        $region66: #{decoder_layer.1} parent=63 // pred_check_branch
          %414 = sbr.rel (%p412) target = $region68
        $region67: #{decoder_layer.1} parent=63 // pred_region
          %p415 = scmp.lt.s32.totalorder %s24, 1
          %s416 = scalar_select %p415, %s24, 1
          %s417 = smul.addr %s416, 8
          %s418 = scalar_lea.vmem %s0, %s417
        $region68: #{decoder_layer.1} parent=63 // pred_fallthru
          _
      $region64: #{decoder_layer.1} parent=5 // pred_fallthru
        _
      %p419 = scmp.le.s32.totalorder 1, %s24
      %p420 = scmp.lt.s32.totalorder %s24, 3
      %p421 = pnand %p419, %p420
      %p422 = pneg %p421
      // Predicated region
      $region69: #{decoder_layer.1} parent=5 // pred_check
        _
      $region70: #{decoder_layer.1} parent=5 // pred_check_branch
        %424 = sbr.rel (%p421) target = $region72
      $region71: #{decoder_layer.1} parent=5 // pred_region
        %s425 = ssub.s32 %s24, 1
        // Predicated region
        $region73: #{decoder_layer.1} parent=71 // pred_check
          %p426 = pneg %p176
        $region74: #{decoder_layer.1} parent=71 // pred_check_branch
          %428 = sbr.rel (%p426) target = $region76
        $region75: #{decoder_layer.1} parent=71 // pred_region
          %430 = dma.done [#allocation3], 16
        $region76: #{decoder_layer.1} parent=71 // pred_fallthru
          _
        // Predicated region
        $region77: #{decoder_layer.1} parent=71 // pred_check
          %p431 = pneg %p197
        $region78: #{decoder_layer.1} parent=71 // pred_check_branch
          %433 = sbr.rel (%p431) target = $region80
        $region79: #{decoder_layer.1} parent=71 // pred_region
          %435 = dma.done [#allocation6], 256
        $region80: #{decoder_layer.1} parent=71 // pred_fallthru
          _
        // Predicated region
        $region81: #{decoder_layer.1} parent=71 // pred_check
          %p436 = pneg %p302
        $region82: #{decoder_layer.1} parent=71 // pred_check_branch
          %438 = sbr.rel (%p436) target = $region84
        $region83: #{decoder_layer.1} parent=71 // pred_region
          %440 = dma.done [#allocation6], 16
        $region84: #{decoder_layer.1} parent=71 // pred_fallthru
          _
        %p441 = scmp.lt.s32.totalorder %s29, 1
        %s442 = scalar_select %p441, %s29, 1
        %s443 = smul.addr %s442, 8
        %s444 = scalar_lea.vmem %s0, %s443
        %p445 = pneg %p50
        %p446 = pneg %p47
        %p447 = pneg %p71
        %p448 = pneg %p68
        %p449 = pneg %p92
        %p450 = pneg %p89
        %p451 = pneg %p113
        %p452 = pneg %p110
        %p453 = pneg %p134
        %p454 = pneg %p131
        %p455 = pneg %p155
        %p456 = pneg %p152
        %p457 = pneg %p176
        %p458 = pneg %p173
        %p459 = pneg %p197
        %p460 = pneg %p194
        %p461 = pneg %p218
        %p462 = pneg %p215
        %p463 = pneg %p239
        %p464 = pneg %p236
        %p465 = pneg %p260
        %p466 = pneg %p257
        %p467 = pneg %p281
        %p468 = pneg %p278
        %p469 = pneg %p302
        %p470 = pneg %p299
        %p471 = pneg %p328
        %p472 = pneg %p325
        %s473 = sand.u32 %s315, 1
        %s474 = scalar_lea.sflag [#allocation4], %s473
        %s475 = sand.u32 %s315, 1
        %s476 = smul.addr %s475, 8
        %s477 = scalar_lea.vmem [#allocation8], %s476
        %p478 = scmp.lt.s32.totalorder %s29, 1
        %s479 = scalar_select %p478, %s29, 1
        %s480 = smul.addr %s479, 8
        %s481 = scalar_lea.vmem %s0, %s480
        %v483 = vld [vmem:[%s481] sm:$0xff]
        %v484 = vpack.c.bf16 %v483, %v483
        %v485 = vld [vmem:[%s1] sm:$0xf]
        %v486 = vld [vmem:[%s1 + $0x4] sm:$0xf]
        %v487 = vld [vmem:[%s1 + $0x8] sm:$0xf]
        %v488 = vld [vmem:[%s1 + $0xc] sm:$0xf]
        %v489 = vld [vmem:[%s2] sm:$0x1]
        %v491 = vperm.slane %v489, 0
        %v497 = vunpack.c.l.b16 %v485
        %v498 = vunpack.c.l.b16 %v486
        %v499 = vunpack.c.l.b16 %v487
        %v500 = vunpack.c.l.b16 %v488
        %v501 = vpack.c.b16 %v498, %v497
        %v502 = vpack.c.b16 %v500, %v499
        %vm505 = vcmask 261120
        %v507 = vsel %vm505, %v484, 0
        %509 = vmatpush.bf16.msra.mxu0 0
        %510 = vmatpush.bf16.msra.mxu0 0
        %511 = vmatpush.bf16.msra.mxu0 0
        %512 = vmatpush.bf16.msra.mxu0 0
        %513 = vmatpush.bf16.msra.mxu0 0
        %514 = vmatpush.bf16.msra.mxu0 0
        %515 = vmatpush.bf16.msra.mxu0 %v502
        %516 = vmatpush.bf16.msra.mxu0 %v501
        %517 = vmatmul.bf16.gmra.mxu0 %v507
        %v518 = vpop.f32.mrf.mxu0
        %v519 = vadd.f32 %v491, %v518
        %v520 = vpop.f32.mrf.mxu0
        %521 = vdwg.mxu0
        %v522 = vlaneseq
        %v523 = vshrl.u32 %v522, 7
        %v524 = vlaneseq
        %v525 = vand.u32 %v524, 127
        %vm526 = vcmp.ge.s32.totalorder %v523, %v525
        %v527 = vld [vmem:[%s3] sm:$0xf]
        %v528 = vld [vmem:[%s3 + $0x4] sm:$0xf]
        %v529 = vld [vmem:[%s3 + $0x8] sm:$0xf]
        %v530 = vld [vmem:[%s3 + $0xc] sm:$0xf]
        %v531 = vpack.c.bf16 %v519, %v519
        %533 = vrot.lane.b32.xlu0 %v531, 96
        %v534 = vpop.permute.xlu0 %533
        %vm535 = vcmask 64512
        %v537 = vsel %vm535, %v531, 0
        %v540 = vsel %vm535, %v534, 0
        %542 = vmatpush.bf16.xpose.msra.mxu0 0
        %543 = vmatpush.bf16.xpose.msra.mxu0 0
        %544 = vmatpush.bf16.xpose.msra.mxu0 0
        %545 = vmatpush.bf16.xpose.msra.mxu0 0
        %546 = vmatpush.bf16.xpose.msra.mxu0 0
        %547 = vmatpush.bf16.xpose.msra.mxu0 0
        %548 = vmatpush.bf16.xpose.msra.mxu0 0
        %549 = vmatpush.bf16.xpose.msra.mxu0 %v540
        %550 = vmatmul.bf16.gmra.mxu0 %v537
        %v551 = vpop.f32.mrf.mxu0
        %v552 = vadd.f32 0.0, %v551
        %v553 = vpop.f32.mrf.mxu0
        %554 = vdwg.mxu0
        %v555 = vsel %vm526, %v552, -1e+30
        %v556 = vsel %vm535, %v555, -inf
        %557 = vmax.xlane.f32.xlu0 %v556
        %v558 = vpop.xlane.xlu0 %557
        %v559 = vsub.f32 %v555, %v558
        %v560 = vmul.f32 %v559, 1.442695
        %v561 = vpow.pop %v560
        %v562 = vsel %vm535, %v561, 0.0
        %563 = vadd.xlane.f32.xlu0 %v562
        %v564 = vpop.xlane.xlu0 %563
        %v565 = vpack.c.bf16 %v561, %v561
        %566 = vrot.lane.b32.xlu0 %v531, 64
        %v567 = vpop.permute.xlu0 %566
        %v569 = vsel %vm535, %v565, 0
        %vm571 = vcmask 1043456
        %v573 = vsel %vm571, %v567, 0
        %575 = vmatpush.bf16.msra.mxu0 0
        %576 = vmatpush.bf16.msra.mxu0 0
        %577 = vmatpush.bf16.msra.mxu0 0
        %578 = vmatpush.bf16.msra.mxu0 0
        %579 = vmatpush.bf16.msra.mxu0 0
        %580 = vmatpush.bf16.msra.mxu0 0
        %581 = vmatpush.bf16.msra.mxu0 0
        %582 = vmatpush.bf16.msra.mxu0 %v573
        %583 = vmatmul.bf16.gmra.mxu0 %v569
        %v584 = vpop.f32.mrf.mxu0
        %v585 = vadd.f32 0.0, %v584
        %v586 = vpop.f32.mrf.mxu0
        %587 = vdwg.mxu0
        %v588 = vrcp.pop %v564
        %v589 = vmul.f32 %v564, %v588
        %v590 = vsub.f32 1.0, %v589
        %v591 = vmul.f32 %v588, %v590
        %v592 = vadd.f32 %v588, %v591
        %vm593 = vweird.f32 %v564
        %vm594 = vweird.f32 %v588
        %vm595 = vmor %vm593, %vm594
        %v596 = vsel %vm595, %v588, %v592
        %v597 = vand.u32 2147483647, %v564
        %vm598 = vcmp.eq.f32.partialorder %v597, 8.507059e+37
        %v599 = vand.u32 %v564, 2147483648
        %v600 = vor.u32 1.1754944e-38, %v599
        %v601 = vsel %vm598, %v600, %v596
        %v602 = vmul.f32 %v585, %v601
        %v603 = vpack.c.bf16 %v602, %v602
        %604 = vrot.lane.b32.xlu0 %v531, 120
        %v605 = vpop.permute.xlu0 %604
        %606 = vrot.lane.b32.xlu0 %v531, 88
        %v607 = vpop.permute.xlu0 %606
        %v609 = vsel %vm535, %v605, 0
        %v612 = vsel %vm535, %v607, 0
        %614 = vmatpush.bf16.xpose.msra.mxu0 0
        %615 = vmatpush.bf16.xpose.msra.mxu0 0
        %616 = vmatpush.bf16.xpose.msra.mxu0 0
        %617 = vmatpush.bf16.xpose.msra.mxu0 0
        %618 = vmatpush.bf16.xpose.msra.mxu0 0
        %619 = vmatpush.bf16.xpose.msra.mxu0 0
        %620 = vmatpush.bf16.xpose.msra.mxu0 0
        %621 = vmatpush.bf16.xpose.msra.mxu0 %v612
        %622 = vmatmul.bf16.gmra.mxu0 %v609
        %v623 = vpop.f32.mrf.mxu0
        %v624 = vadd.f32 0.0, %v623
        %v625 = vpop.f32.mrf.mxu0
        %626 = vdwg.mxu0
        %v627 = vsel %vm526, %v624, -1e+30
        %v628 = vsel %vm535, %v627, -inf
        %629 = vmax.xlane.f32.xlu0 %v628
        %v630 = vpop.xlane.xlu0 %629
        %v631 = vsub.f32 %v627, %v630
        %v632 = vmul.f32 %v631, 1.442695
        %v633 = vpow.pop %v632
        %v634 = vsel %vm535, %v633, 0.0
        %635 = vadd.xlane.f32.xlu0 %v634
        %v636 = vpop.xlane.xlu0 %635
        %v637 = vpack.c.bf16 %v633, %v633
        %638 = vrot.lane.b32.xlu0 %v531, 56
        %v639 = vpop.permute.xlu0 %638
        %v641 = vsel %vm535, %v637, 0
        %v644 = vsel %vm571, %v639, 0
        %646 = vmatpush.bf16.msra.mxu0 0
        %647 = vmatpush.bf16.msra.mxu0 0
        %648 = vmatpush.bf16.msra.mxu0 0
        %649 = vmatpush.bf16.msra.mxu0 0
        %650 = vmatpush.bf16.msra.mxu0 0
        %651 = vmatpush.bf16.msra.mxu0 0
        %652 = vmatpush.bf16.msra.mxu0 0
        %653 = vmatpush.bf16.msra.mxu0 %v644
        %654 = vmatmul.bf16.gmra.mxu0 %v641
        %v655 = vpop.f32.mrf.mxu0
        %v656 = vadd.f32 0.0, %v655
        %v657 = vpop.f32.mrf.mxu0
        %658 = vdwg.mxu0
        %v659 = vrcp.pop %v636
        %v660 = vmul.f32 %v636, %v659
        %v661 = vsub.f32 1.0, %v660
        %v662 = vmul.f32 %v659, %v661
        %v663 = vadd.f32 %v659, %v662
        %vm664 = vweird.f32 %v636
        %vm665 = vweird.f32 %v659
        %vm666 = vmor %vm664, %vm665
        %v667 = vsel %vm666, %v659, %v663
        %v668 = vand.u32 2147483647, %v636
        %vm669 = vcmp.eq.f32.partialorder %v668, 8.507059e+37
        %v670 = vand.u32 %v636, 2147483648
        %v671 = vor.u32 1.1754944e-38, %v670
        %v672 = vsel %vm669, %v671, %v667
        %v673 = vmul.f32 %v656, %v672
        %v674 = vpack.c.bf16 %v673, %v673
        %v676 = vsel %vm535, %v674, 0
        %v679 = vsel %vm571, %v528, 0
        %681 = vmatpush.bf16.msra.mxu0 0
        %682 = vmatpush.bf16.msra.mxu0 0
        %683 = vmatpush.bf16.msra.mxu0 0
        %684 = vmatpush.bf16.msra.mxu0 0
        %685 = vmatpush.bf16.msra.mxu0 0
        %686 = vmatpush.bf16.msra.mxu0 0
        %687 = vmatpush.bf16.msra.mxu0 0
        %688 = vmatpush.bf16.msra.mxu0 %v679
        %689 = vmatmul.bf16.gmra.mxu0 %v676
        %v690 = vpop.f32.mrf.mxu0
        %v691 = vadd.f32 0.0, %v690
        %v692 = vpop.f32.mrf.mxu0
        %693 = vdwg.mxu0
        %v695 = vsel %vm535, %v603, 0
        %v698 = vsel %vm571, %v527, 0
        %700 = vmatpush.bf16.msra.mxu0 0
        %701 = vmatpush.bf16.msra.mxu0 0
        %702 = vmatpush.bf16.msra.mxu0 0
        %703 = vmatpush.bf16.msra.mxu0 0
        %704 = vmatpush.bf16.msra.mxu0 0
        %705 = vmatpush.bf16.msra.mxu0 0
        %706 = vmatpush.bf16.msra.mxu0 0
        %707 = vmatpush.bf16.msra.mxu0 %v698
        %708 = vmatmul.bf16.gmra.mxu0 %v695
        %v709 = vpop.f32.mrf.mxu0
        %v710 = vadd.f32 %v691, %v709
        %v711 = vpop.f32.mrf.mxu0
        %712 = vdwg.mxu0
        %713 = vrot.lane.b32.xlu0 %v531, 112
        %v714 = vpop.permute.xlu0 %713
        %715 = vrot.lane.b32.xlu0 %v531, 80
        %v716 = vpop.permute.xlu0 %715
        %v718 = vsel %vm535, %v714, 0
        %v721 = vsel %vm535, %v716, 0
        %723 = vmatpush.bf16.xpose.msra.mxu0 0
        %724 = vmatpush.bf16.xpose.msra.mxu0 0
        %725 = vmatpush.bf16.xpose.msra.mxu0 0
        %726 = vmatpush.bf16.xpose.msra.mxu0 0
        %727 = vmatpush.bf16.xpose.msra.mxu0 0
        %728 = vmatpush.bf16.xpose.msra.mxu0 0
        %729 = vmatpush.bf16.xpose.msra.mxu0 0
        %730 = vmatpush.bf16.xpose.msra.mxu0 %v721
        %731 = vmatmul.bf16.gmra.mxu0 %v718
        %v732 = vpop.f32.mrf.mxu0
        %v733 = vadd.f32 0.0, %v732
        %v734 = vpop.f32.mrf.mxu0
        %735 = vdwg.mxu0
        %v736 = vsel %vm526, %v733, -1e+30
        %v737 = vsel %vm535, %v736, -inf
        %738 = vmax.xlane.f32.xlu0 %v737
        %v739 = vpop.xlane.xlu0 %738
        %v740 = vsub.f32 %v736, %v739
        %v741 = vmul.f32 %v740, 1.442695
        %v742 = vpow.pop %v741
        %v743 = vsel %vm535, %v742, 0.0
        %744 = vadd.xlane.f32.xlu0 %v743
        %v745 = vpop.xlane.xlu0 %744
        %v746 = vpack.c.bf16 %v742, %v742
        %747 = vrot.lane.b32.xlu0 %v531, 48
        %v748 = vpop.permute.xlu0 %747
        %v750 = vsel %vm535, %v746, 0
        %v753 = vsel %vm571, %v748, 0
        %755 = vmatpush.bf16.msra.mxu0 0
        %756 = vmatpush.bf16.msra.mxu0 0
        %757 = vmatpush.bf16.msra.mxu0 0
        %758 = vmatpush.bf16.msra.mxu0 0
        %759 = vmatpush.bf16.msra.mxu0 0
        %760 = vmatpush.bf16.msra.mxu0 0
        %761 = vmatpush.bf16.msra.mxu0 0
        %762 = vmatpush.bf16.msra.mxu0 %v753
        %763 = vmatmul.bf16.gmra.mxu0 %v750
        %v764 = vpop.f32.mrf.mxu0
        %v765 = vadd.f32 0.0, %v764
        %v766 = vpop.f32.mrf.mxu0
        %767 = vdwg.mxu0
        %v768 = vrcp.pop %v745
        %v769 = vmul.f32 %v745, %v768
        %v770 = vsub.f32 1.0, %v769
        %v771 = vmul.f32 %v768, %v770
        %v772 = vadd.f32 %v768, %v771
        %vm773 = vweird.f32 %v745
        %vm774 = vweird.f32 %v768
        %vm775 = vmor %vm773, %vm774
        %v776 = vsel %vm775, %v768, %v772
        %v777 = vand.u32 2147483647, %v745
        %vm778 = vcmp.eq.f32.partialorder %v777, 8.507059e+37
        %v779 = vand.u32 %v745, 2147483648
        %v780 = vor.u32 1.1754944e-38, %v779
        %v781 = vsel %vm778, %v780, %v776
        %v782 = vmul.f32 %v765, %v781
        %v783 = vpack.c.bf16 %v782, %v782
        %v785 = vsel %vm535, %v783, 0
        %v788 = vsel %vm571, %v529, 0
        %790 = vmatpush.bf16.msra.mxu0 0
        %791 = vmatpush.bf16.msra.mxu0 0
        %792 = vmatpush.bf16.msra.mxu0 0
        %793 = vmatpush.bf16.msra.mxu0 0
        %794 = vmatpush.bf16.msra.mxu0 0
        %795 = vmatpush.bf16.msra.mxu0 0
        %796 = vmatpush.bf16.msra.mxu0 0
        %797 = vmatpush.bf16.msra.mxu0 %v788
        %798 = vmatmul.bf16.gmra.mxu0 %v785
        %v799 = vpop.f32.mrf.mxu0
        %v800 = vadd.f32 0.0, %v799
        %v801 = vpop.f32.mrf.mxu0
        %802 = vdwg.mxu0
        %v803 = vadd.f32 %v710, %v800
        %804 = vrot.lane.b32.xlu0 %v531, 104
        %v805 = vpop.permute.xlu0 %804
        %806 = vrot.lane.b32.xlu0 %v531, 72
        %v807 = vpop.permute.xlu0 %806
        %v809 = vsel %vm535, %v805, 0
        %v812 = vsel %vm535, %v807, 0
        %814 = vmatpush.bf16.xpose.msra.mxu0 0
        %815 = vmatpush.bf16.xpose.msra.mxu0 0
        %816 = vmatpush.bf16.xpose.msra.mxu0 0
        %817 = vmatpush.bf16.xpose.msra.mxu0 0
        %818 = vmatpush.bf16.xpose.msra.mxu0 0
        %819 = vmatpush.bf16.xpose.msra.mxu0 0
        %820 = vmatpush.bf16.xpose.msra.mxu0 0
        %821 = vmatpush.bf16.xpose.msra.mxu0 %v812
        %822 = vmatmul.bf16.gmra.mxu0 %v809
        %v823 = vpop.f32.mrf.mxu0
        %v824 = vadd.f32 0.0, %v823
        %v825 = vpop.f32.mrf.mxu0
        %826 = vdwg.mxu0
        %v827 = vsel %vm526, %v824, -1e+30
        %v828 = vsel %vm535, %v827, -inf
        %829 = vmax.xlane.f32.xlu0 %v828
        %v830 = vpop.xlane.xlu0 %829
        %v831 = vsub.f32 %v827, %v830
        %v832 = vmul.f32 %v831, 1.442695
        %v833 = vpow.pop %v832
        %v834 = vsel %vm535, %v833, 0.0
        %835 = vadd.xlane.f32.xlu0 %v834
        %v836 = vpop.xlane.xlu0 %835
        %v837 = vpack.c.bf16 %v833, %v833
        %838 = vrot.lane.b32.xlu0 %v531, 40
        %v839 = vpop.permute.xlu0 %838
        %v841 = vsel %vm535, %v837, 0
        %v844 = vsel %vm571, %v839, 0
        %846 = vmatpush.bf16.msra.mxu0 0
        %847 = vmatpush.bf16.msra.mxu0 0
        %848 = vmatpush.bf16.msra.mxu0 0
        %849 = vmatpush.bf16.msra.mxu0 0
        %850 = vmatpush.bf16.msra.mxu0 0
        %851 = vmatpush.bf16.msra.mxu0 0
        %852 = vmatpush.bf16.msra.mxu0 0
        %853 = vmatpush.bf16.msra.mxu0 %v844
        %854 = vmatmul.bf16.gmra.mxu0 %v841
        %v855 = vpop.f32.mrf.mxu0
        %v856 = vadd.f32 0.0, %v855
        %v857 = vpop.f32.mrf.mxu0
        %858 = vdwg.mxu0
        %v859 = vrcp.pop %v836
        %v860 = vmul.f32 %v836, %v859
        %v861 = vsub.f32 1.0, %v860
        %v862 = vmul.f32 %v859, %v861
        %v863 = vadd.f32 %v859, %v862
        %vm864 = vweird.f32 %v836
        %vm865 = vweird.f32 %v859
        %vm866 = vmor %vm864, %vm865
        %v867 = vsel %vm866, %v859, %v863
        %v868 = vand.u32 2147483647, %v836
        %vm869 = vcmp.eq.f32.partialorder %v868, 8.507059e+37
        %v870 = vand.u32 %v836, 2147483648
        %v871 = vor.u32 1.1754944e-38, %v870
        %v872 = vsel %vm869, %v871, %v867
        %v873 = vmul.f32 %v856, %v872
        %v874 = vpack.c.bf16 %v873, %v873
        %v876 = vsel %vm535, %v874, 0
        %v879 = vsel %vm571, %v530, 0
        %881 = vmatpush.bf16.msra.mxu0 0
        %882 = vmatpush.bf16.msra.mxu0 0
        %883 = vmatpush.bf16.msra.mxu0 0
        %884 = vmatpush.bf16.msra.mxu0 0
        %885 = vmatpush.bf16.msra.mxu0 0
        %886 = vmatpush.bf16.msra.mxu0 0
        %887 = vmatpush.bf16.msra.mxu0 0
        %888 = vmatpush.bf16.msra.mxu0 %v879
        %889 = vmatmul.bf16.gmra.mxu0 %v876
        %v890 = vpop.f32.mrf.mxu0
        %v891 = vadd.f32 0.0, %v890
        %v892 = vpop.f32.mrf.mxu0
        %893 = vdwg.mxu0
        %v894 = vadd.f32 %v803, %v891
        %v895 = vld [vmem:[%s4] sm:$0x1]
        %v897 = vperm.slane %v895, 0
        %v899 = vadd.f32 %v894, %v897
        %v900 = vadd.f32 %v483, %v899
        %v901 = vsel %vm505, %v900, 0.0
        %902 = vadd.xlane.f32.xlu0 %v901
        %v903 = vpop.xlane.xlu0 %902
        %v904 = vrcp.pop 32.0
        %v905 = vmul.f32 32.0, %v904
        %v906 = vsub.f32 1.0, %v905
        %v907 = vmul.f32 %v904, %v906
        %v908 = vadd.f32 %v904, %v907
        %vm909 = vweird.f32 %v904
        %v910 = vsel %vm909, %v904, %v908
        %v911 = vmul.f32 %v903, %v910
        %v912 = vsub.f32 %v900, %v911
        %v913 = vmul.f32 %v912, %v912
        %v914 = vsel %vm505, %v913, 0.0
        %915 = vadd.xlane.f32.xlu0 %v914
        %v916 = vpop.xlane.xlu0 %915
        %v917 = vmul.f32 %v916, %v910
        %v918 = vadd.f32 %v917, 1e-05
        %v919 = vrsqrt.pop %v918
        %v920 = vmul.f32 %v919, %v918
        %v921 = vmul.f32 %v920, %v919
        %v922 = vmul.f32 0.5, %v921
        %v923 = vsub.f32 1.5, %v922
        %v924 = vmul.f32 %v919, %v923
        %vm925 = vweird.f32 %v918
        %vm926 = vweird.f32 %v919
        %vm927 = vmor %vm925, %vm926
        %v928 = vsel %vm927, %v919, %v924
        %v929 = vmul.f32 %v912, %v928
        %v930 = vld [vmem:[%s5] sm:$0x1]
        %v932 = vperm.slane %v930, 0
        %v934 = vmul.f32 %v929, %v932
        %v935 = vld [vmem:[#allocation2] sm:$0x1]
        %v937 = vperm.slane %v935, 0
        %v939 = vadd.f32 %v934, %v937
        %v940 = vpack.c.bf16 %v939, %v939
        %v941 = vld [vmem:[#allocation5] sm:$0xf]
        %v942 = vld [vmem:[#allocation5 + $0x4] sm:$0xf]
        %v943 = vld [vmem:[#allocation5 + $0x8] sm:$0xf]
        %v944 = vld [vmem:[#allocation5 + $0xc] sm:$0xf]
        %v945 = vld [vmem:[%s8] sm:$0x1]
        %v947 = vperm.slane %v945, 0
        %v953 = vunpack.c.l.b16 %v941
        %v954 = vunpack.c.l.b16 %v942
        %v955 = vunpack.c.l.b16 %v943
        %v956 = vunpack.c.l.b16 %v944
        %v957 = vpack.c.b16 %v954, %v953
        %v958 = vpack.c.b16 %v956, %v955
        %v962 = vsel %vm505, %v940, 0
        %964 = vmatpush.bf16.msra.mxu0 0
        %965 = vmatpush.bf16.msra.mxu0 0
        %966 = vmatpush.bf16.msra.mxu0 0
        %967 = vmatpush.bf16.msra.mxu0 0
        %968 = vmatpush.bf16.msra.mxu0 0
        %969 = vmatpush.bf16.msra.mxu0 0
        %970 = vmatpush.bf16.msra.mxu0 %v958
        %971 = vmatpush.bf16.msra.mxu0 %v957
        %972 = vmatmul.bf16.gmra.mxu0 %v962
        %v973 = vpop.f32.mrf.mxu0
        %v974 = vadd.f32 %v947, %v973
        %v975 = vpop.f32.mrf.mxu0
        %976 = vdwg.mxu0
        %v977 = vmax.f32 %v974, 0.0
        %v978 = vpack.c.bf16 %v977, %v977
        %v979 = vld [vmem:[%s9] sm:$0xf]
        %v980 = vld [vmem:[%s9 + $0x4] sm:$0xf]
        %v981 = vld [vmem:[%s9 + $0x8] sm:$0xf]
        %v982 = vld [vmem:[%s9 + $0xc] sm:$0xf]
        %v983 = vld [vmem:[%s9 + $0x10] sm:$0xf]
        %v984 = vld [vmem:[%s9 + $0x14] sm:$0xf]
        %v985 = vld [vmem:[%s9 + $0x18] sm:$0xf]
        %v986 = vld [vmem:[%s9 + $0x1c] sm:$0xf]
        %v987 = vld [vmem:[%s10] sm:$0x1]
        %v989 = vperm.slane %v987, 0
        %v999 = vunpack.c.l.b16 %v979
        %v1000 = vunpack.c.l.b16 %v980
        %v1001 = vunpack.c.l.b16 %v981
        %v1002 = vunpack.c.l.b16 %v982
        %v1003 = vunpack.c.l.b16 %v983
        %v1004 = vunpack.c.l.b16 %v984
        %v1005 = vunpack.c.l.b16 %v985
        %v1006 = vunpack.c.l.b16 %v986
        %v1007 = vpack.c.b16 %v1000, %v999
        %v1008 = vpack.c.b16 %v1002, %v1001
        %v1009 = vpack.c.b16 %v1004, %v1003
        %v1010 = vpack.c.b16 %v1006, %v1005
        %vm1015 = vcmask 523264
        %v1017 = vsel %vm1015, %v978, 0
        %1019 = vmatpush.bf16.msra.mxu0 0
        %1020 = vmatpush.bf16.msra.mxu0 0
        %1021 = vmatpush.bf16.msra.mxu0 0
        %1022 = vmatpush.bf16.msra.mxu0 0
        %1023 = vmatpush.bf16.msra.mxu0 %v1010
        %1024 = vmatpush.bf16.msra.mxu0 %v1009
        %1025 = vmatpush.bf16.msra.mxu0 %v1008
        %1026 = vmatpush.bf16.msra.mxu0 %v1007
        %1027 = vmatmul.bf16.gmra.mxu0 %v1017
        %v1028 = vpop.f32.mrf.mxu0
        %v1029 = vadd.f32 %v989, %v1028
        %v1030 = vpop.f32.mrf.mxu0
        %1031 = vdwg.mxu0
        %v1032 = vadd.f32 %v939, %v1029
        %v1033 = vsel %vm505, %v1032, 0.0
        %1034 = vadd.xlane.f32.xlu0 %v1033
        %v1035 = vpop.xlane.xlu0 %1034
        %v1036 = vmul.f32 %v1035, %v910
        %v1037 = vsub.f32 %v1032, %v1036
        %v1038 = vmul.f32 %v1037, %v1037
        %v1039 = vsel %vm505, %v1038, 0.0
        %1040 = vadd.xlane.f32.xlu0 %v1039
        %v1041 = vpop.xlane.xlu0 %1040
        %v1042 = vmul.f32 %v1041, %v910
        %v1043 = vadd.f32 %v1042, 1e-05
        %v1044 = vrsqrt.pop %v1043
        %v1045 = vmul.f32 %v1044, %v1043
        %v1046 = vmul.f32 %v1045, %v1044
        %v1047 = vmul.f32 0.5, %v1046
        %v1048 = vsub.f32 1.5, %v1047
        %v1049 = vmul.f32 %v1044, %v1048
        %vm1050 = vweird.f32 %v1043
        %vm1051 = vweird.f32 %v1044
        %vm1052 = vmor %vm1050, %vm1051
        %v1053 = vsel %vm1052, %v1044, %v1049
        %v1054 = vmul.f32 %v1037, %v1053
        %v1055 = vld [vmem:[%s11] sm:$0x1]
        %v1057 = vperm.slane %v1055, 0
        %v1059 = vmul.f32 %v1054, %v1057
        %v1060 = vld [vmem:[#allocation7] sm:$0x1]
        %v1062 = vperm.slane %v1060, 0
        %v1064 = vadd.f32 %v1059, %v1062
        %1065 = vst.msk [vmem:[%s477] sm:$0xff] %vm505, %v1064
        %s1066 = sand.u32 %s315, 1
        %s1067 = scalar_lea.sflag [#allocation4], %s1066
        %s1068 = sand.u32 %s315, 1
        %s1069 = smul.addr %s1068, 8
        %s1070 = scalar_lea.vmem [#allocation8], %s1069
        // Predicated region
        $region85: #{decoder_layer.1} parent=71 // pred_check
          %p1071 = pneg %p325
        $region86: #{decoder_layer.1} parent=71 // pred_check_branch
          %1073 = sbr.rel (%p1071) target = $region88
        $region87: #{decoder_layer.1} parent=71 // pred_region
          %1075 = vsyncadd %s1067, 0
          %s1076 = smul.addr %s29, 8
          %s1077 = scalar_lea.hbm %s13, %s1076
          %s1079 = sshll.u32 %s1070, 4
          %s1080 = int_to_ptr.vmem [resolvable:$true] %s1079
          %s1081 = sshll.u32 %s1077, 4
          %s1082 = int_to_ptr.hbm [resolvable:$true] %s1081
          %1084 = dma.vmem_to_hbm [thread:$0]  %s1080, 128, %s1082, %s1067
        $region88: #{decoder_layer.1} parent=71 // pred_fallthru
          _
      $region72: #{decoder_layer.1} parent=5 // pred_fallthru
        _
      %p1085 = scmp.le.s32.totalorder 2, %s24
      // Predicated region
      $region89: #{decoder_layer.1} parent=5 // pred_check
        %p1086 = pneg %p1085
      $region90: #{decoder_layer.1} parent=5 // pred_check_branch
        %1088 = sbr.rel (%p1086) target = $region92
      $region91: #{decoder_layer.1} parent=5 // pred_region
        %s1089 = ssub.s32 %s24, 2
        // Predicated region
        $region93: #{decoder_layer.1} parent=91 // pred_check
          %p1090 = pneg %p331
        $region94: #{decoder_layer.1} parent=91 // pred_check_branch
          %1092 = sbr.rel (%p1090) target = $region96
        $region95: #{decoder_layer.1} parent=91 // pred_region
          %s1093 = sand.u32 %s316, 1
          %s1094 = scalar_lea.sflag [#allocation4], %s1093
          %s1095 = sand.u32 %s316, 1
          %s1096 = smul.addr %s1095, 8
          %s1097 = scalar_lea.vmem [#allocation8], %s1096
          %1099 = dma.done %s1094, 128
        $region96: #{decoder_layer.1} parent=91 // pred_fallthru
          _
      $region92: #{decoder_layer.1} parent=5 // pred_fallthru
        _
    $region6: #{decoder_layer.1} parent=1 // loop_footer
      %s28 = sadd.s32 1, %s24
    $region7: #{decoder_layer.1} parent=1 // loop_footer_branch
      %23 = sbr.rel target = $region3
    $region8: #{decoder_layer.1} parent=1 // loop_exit
      _
    %1100 = vsyncpa [#allocation3], 1
    %s1101 = scalar_lea.sflag [#allocation3], 1
    %1102 = vsyncpa %s1101, 1
    %1103 = vsyncpa [#allocation6], 1
    %1104 = vsyncpa [#allocation4], 1
    %s1105 = scalar_lea.sflag [#allocation4], 1
    %1106 = vsyncpa %s1105, 1

</llo_original>
